<compile_context>
chip_gen: v5e
topology: v5e:2x2
jax: 0.10.0
libtpu: 0.0.40
codegen_flags: <defaults>
</compile_context>

<pallas_src>
import functools

import jax
import jax.numpy as jnp
from jax.experimental import pallas as pl
from jax.experimental.pallas import tpu as pltpu

_LANE = 128


def _round_up(x, m):
    return (x + m - 1) // m * m


def _gru_chunk_kernel(gi_ref, h0_ref, wh_ref, bh_ref, out_ref, h_scr, *,
                      chunk, gate_pad):
    """One grid step == `chunk` tokens of the GRU recurrence.

    gi_ref : (chunk, 3G) f32   precomputed input projection (x @ W_ih^T + b_ih)
    h0_ref : (1, Hp)     f32   initial hidden state
    wh_ref : (Hp, 3G)    bf16/f32  recurrent weights (resident across the grid)
    bh_ref : (1, 3G)     f32   recurrent bias
    out_ref: (chunk, Hp) f32   per-token hidden states
    h_scr  : (1, Hp)     f32   VMEM-resident hidden state across chunks
    """
    G = gate_pad

    @pl.when(pl.program_id(0) == 0)
    def _():
        h_scr[...] = h0_ref[...]

    wh = wh_ref[...]            # resident recurrent weights
    bh = bh_ref[...]
    h = h_scr[...]              # read ONCE per chunk; carried in vregs below

    # Fully-unrolled inner loop over the chunk (the unrolled form of
    # lax.fori_loop(..., unroll=True)): only the recurrent matmul is on the
    # serial critical path, hidden state never round-trips through VMEM.
    for t in range(chunk):
        gi = gi_ref[pl.ds(t, 1), :]                                # (1, 3G) f32
        gh = jnp.dot(h.astype(wh.dtype), wh,
                     preferred_element_type=jnp.float32) + bh      # (1, 3G) f32

        # Gate slices land exactly on 128-lane boundaries (lane-dense).
        r = jax.nn.sigmoid(gi[:, 0:G] + gh[:, 0:G])
        z = jax.nn.sigmoid(gi[:, G:2 * G] + gh[:, G:2 * G])
        n = jnp.tanh(gi[:, 2 * G:3 * G] + r * gh[:, 2 * G:3 * G])

        h = (1.0 - z) * n + z * h          # f32; padded lanes stay exactly 0
        out_ref[pl.ds(t, 1), :] = h

    h_scr[...] = h                          # write back ONCE per chunk


def prepare_params(params, weight_dtype=jnp.bfloat16):
    """One-time packing of PyTorch-layout parameters (off the hot path).

    params: 'embedding' (V,H), 'w_ih' (3H,H), 'w_hh' (3H,H), 'b_ih' (3H,),
            'b_hh' (3H,)  -- PyTorch shapes, gate order [r, z, n].
    Weight matrices are stored in `weight_dtype` (bf16 by default: MXU-native,
    half the HBM/VMEM bytes); biases stay f32 (activation path).
    """
    emb = jnp.asarray(params["embedding"], jnp.float32)
    V, H = emb.shape
    Hp = _round_up(H, _LANE)   # padded hidden width (lane-aligned)
    G = Hp                     # padded per-gate width (lane-aligned)

    emb_p = jnp.zeros((V, Hp), jnp.float32).at[:, :H].set(emb).astype(weight_dtype)

    def pack_w(w):  # (3H, H) -> (Hp, 3G), transposed + gate-padded
        w_t = jnp.asarray(w, jnp.float32).T                    # (H, 3H)
        out = jnp.zeros((Hp, 3 * G), jnp.float32)
        for g in range(3):
            out = out.at[:H, g * G:g * G + H].set(w_t[:, g * H:(g + 1) * H])
        return out.astype(weight_dtype)

    def pack_b(b):  # (3H,) -> (1, 3G), gate-padded, kept f32
        b = jnp.asarray(b, jnp.float32)
        out = jnp.zeros((1, 3 * G), jnp.float32)
        for g in range(3):
            out = out.at[0, g * G:g * G + H].set(b[g * H:(g + 1) * H])
        return out

    return {
        "H": H, "Hp": Hp, "G": G, "V": V,
        "emb": emb_p,
        "wi": pack_w(params["w_ih"]),
        "wh": pack_w(params["w_hh"]),
        "bi": pack_b(params["b_ih"]),
        "bh": pack_b(params["b_hh"]),
    }


def encoder_rnn_sequence(tokens, hidden, prep, *, chunk=16):
    """Run the encoder over a whole token sequence in ONE pallas_call.

    Args:
      tokens: (T,) int token ids.
      hidden: (1, 1, H) float32 initial hidden state.
      prep  : output of prepare_params().
      chunk : tokens processed per grid step (rounded to a multiple of 8).

    Returns:
      outputs (T, 1, H) and final hidden (1, 1, H) -- equivalent to calling
      EncoderRNN.forward once per token and stacking the outputs.
    """
    H, Hp, G, V = prep["H"], prep["Hp"], prep["G"], prep["V"]

    tokens = jnp.clip(jnp.asarray(tokens, jnp.int32).reshape(-1), 0, V - 1)
    T = int(tokens.shape[0])

    chunk = max(8, min(_round_up(int(chunk), 8), _round_up(T, 8)))
    n_chunks = (T + chunk - 1) // chunk
    T_pad = n_chunks * chunk

    # ---- Hoisted input projection (non-recurrent half), one batched matmul.
    x_all = jnp.take(prep["emb"], tokens, axis=0)                  # (T, Hp)
    gi_all = jnp.dot(x_all, prep["wi"],
                     preferred_element_type=jnp.float32,
                     precision=jax.lax.Precision.HIGHEST) + prep["bi"]
    gi_all = jnp.zeros((T_pad, 3 * G), jnp.float32).at[:T].set(gi_all)

    h0 = jnp.zeros((1, Hp), jnp.float32).at[:, :H].set(
        hidden.reshape(1, H).astype(jnp.float32))

    kernel = functools.partial(_gru_chunk_kernel, chunk=chunk, gate_pad=G)

    grid_spec = pltpu.PrefetchScalarGridSpec(
        num_scalar_prefetch=0,
        grid=(n_chunks,),
        in_specs=[
            pl.BlockSpec((chunk, 3 * G), lambda c: (c, 0)),      # gi chunk
            pl.BlockSpec((1, Hp), lambda c: (0, 0)),             # h0
            pl.BlockSpec((Hp, 3 * G), lambda c: (0, 0)),         # W_hh^T (resident)
            pl.BlockSpec((1, 3 * G), lambda c: (0, 0)),          # b_hh
        ],
        out_specs=pl.BlockSpec((chunk, Hp), lambda c: (c, 0)),   # per-token hidden
        scratch_shapes=[pltpu.VMEM((1, Hp), jnp.float32)],       # resident h state
    )

    # Raise the scoped-VMEM limit only when the resident buffers need it.
    w_bytes = prep["wh"].dtype.itemsize
    vmem_est = (2 * chunk * 3 * G * 4 + 2 * chunk * Hp * 4
                + 2 * Hp * 3 * G * w_bytes
                + 2 * Hp * 4 + 2 * 3 * G * 4 + Hp * 4)
    vmem_limit = int(vmem_est + (4 << 20)) if vmem_est > (32 << 20) else None

    out_p = pl.pallas_call(
        kernel,
        out_shape=jax.ShapeDtypeStruct((T_pad, Hp), jnp.float32),
        grid_spec=grid_spec,
        compiler_params=pltpu.CompilerParams(
            dimension_semantics=("arbitrary",),      # sequential recurrence
            vmem_limit_bytes=vmem_limit),
    )(gi_all, h0, prep["wh"], prep["bh"])

    outputs = out_p[:T, :H].reshape(T, 1, H)
    hidden_new = out_p[T - 1, :H].reshape(1, 1, H)   # last real step's hidden
    return outputs, hidden_new


def encoder_rnn_forward(token, hidden, prep):
    """Single-step forward matching EncoderRNN.forward: returns ((1,1,H), (1,1,H))."""
    tok = jnp.asarray(token, dtype=jnp.int32).reshape(1)
    out, hid = encoder_rnn_sequence(tok, hidden, prep)
    H = prep["H"]
    return out.reshape(1, 1, H), hid


def _reference_sequence(tokens, hidden, params):
    """Pure-JAX f32 reference: nn.Embedding + torch.nn.GRU applied step by step."""
    emb = jnp.asarray(params["embedding"], jnp.float32)
    H = emb.shape[1]
    w_ih = jnp.asarray(params["w_ih"], jnp.float32)
    w_hh = jnp.asarray(params["w_hh"], jnp.float32)
    b_ih = jnp.asarray(params["b_ih"], jnp.float32)
    b_hh = jnp.asarray(params["b_hh"], jnp.float32)
    hi = jax.lax.Precision.HIGHEST
    h = hidden.reshape(1, H).astype(jnp.float32)
    outs = []
    for tok in list(jnp.asarray(tokens).reshape(-1)):
        x = emb[int(tok)].reshape(1, H)
        gi = jnp.dot(x, w_ih.T, precision=hi) + b_ih
        gh = jnp.dot(h, w_hh.T, precision=hi) + b_hh
        r = jax.nn.sigmoid(gi[:, :H] + gh[:, :H])
        z = jax.nn.sigmoid(gi[:, H:2 * H] + gh[:, H:2 * H])
        n = jnp.tanh(gi[:, 2 * H:] + r * gh[:, 2 * H:])
        h = (1.0 - z) * n + z * h
        outs.append(h)
    return jnp.stack(outs).reshape(len(outs), 1, H), h.reshape(1, 1, H)


if __name__ == "__main__":
    VOCAB = 20       # input_size
    H = 32           # hidden_size (small test shape; module default is 256)
    T = 8            # sequence length processed in one pallas_call

    key = jax.random.PRNGKey(0)
    k_emb, k_wi, k_wh, k_bi, k_bh, k_h, k_tok = jax.random.split(key, 7)

    params = {
        "embedding": jax.random.normal(k_emb, (VOCAB, H), dtype=jnp.float32),
        "w_ih": 0.1 * jax.random.normal(k_wi, (3 * H, H), dtype=jnp.float32),
        "w_hh": 0.1 * jax.random.normal(k_wh, (3 * H, H), dtype=jnp.float32),
        "b_ih": 0.1 * jax.random.normal(k_bi, (3 * H,), dtype=jnp.float32),
        "b_hh": 0.1 * jax.random.normal(k_bh, (3 * H,), dtype=jnp.float32),
    }

    tokens = jax.random.randint(k_tok, (T,), 0, VOCAB, dtype=jnp.int32)
    hidden0 = jax.random.normal(k_h, (1, 1, H), dtype=jnp.float32)

    ref_outs, ref_hid = _reference_sequence(tokens, hidden0, params)

    # 1) f32 weights: bit-faithful to the PyTorch module, tight tolerance.
    prep_f32 = prepare_params(params, weight_dtype=jnp.float32)
    outs, hid = encoder_rnn_sequence(tokens, hidden0, prep_f32)
    outs = jax.block_until_ready(outs)
    hid = jax.block_until_ready(hid)
    assert outs.shape == (T, 1, H) and hid.shape == (1, 1, H)
    assert jnp.allclose(outs, ref_outs, atol=1e-5, rtol=1e-5)
    assert jnp.allclose(hid, ref_hid, atol=1e-5, rtol=1e-5)

    # 2) bf16 weights (perf default): half the HBM/VMEM weight bytes, f32 math.
    prep_bf16 = prepare_params(params)          # weight_dtype=bfloat16
    outs_bf, hid_bf = encoder_rnn_sequence(tokens, hidden0, prep_bf16)
    outs_bf = jax.block_until_ready(outs_bf)
    hid_bf = jax.block_until_ready(hid_bf)
    assert jnp.allclose(outs_bf, ref_outs, atol=5e-2)
    assert jnp.allclose(hid_bf, ref_hid, atol=5e-2)

    # 3) Single-step forward (exact EncoderRNN.forward semantics).
    out1, hid1 = encoder_rnn_forward(tokens[0], hidden0, prep_f32)
    out1 = jax.block_until_ready(out1)
    ref_out1, ref_hid1 = _reference_sequence(tokens[:1], hidden0, params)
    assert out1.shape == (1, 1, H) and hid1.shape == (1, 1, H)
    assert jnp.allclose(out1, ref_out1.reshape(1, 1, H), atol=1e-5, rtol=1e-5)
    assert jnp.allclose(hid1, ref_hid1, atol=1e-5, rtol=1e-5)

    print("KERNEL_OK")
</pallas_src>

<mosaic_0001>
module attributes {stable_mosaic.version = 11 : i64} {
  func.func @_gru_chunk_kernel(%arg0: i32, %arg1: memref<8x384xf32, #tpu.memory_space<vmem>>, %arg2: memref<1x128xf32, #tpu.memory_space<vmem>>, %arg3: memref<128x384xf32, #tpu.memory_space<vmem>>, %arg4: memref<1x384xf32, #tpu.memory_space<vmem>>, %arg5: memref<8x128xf32, #tpu.memory_space<vmem>>, %arg6: memref<1x128xf32, #tpu.memory_space<vmem>>) attributes {dimension_semantics = [#tpu.dimension_semantics<arbitrary>], iteration_bounds = array<i64: 1>, scalar_prefetch = 0 : i64, scratch_operands = 1 : i64, tpu.core_type = #tpu.core_type<tc>, window_params = [{transform_indices = @transform_0, window_bounds = array<i64: 8, 384>}, {pipeline_mode = #tpu.pipeline_mode<synchronous>, transform_indices = @transform_1, window_bounds = array<i64: 1, 128>}, {pipeline_mode = #tpu.pipeline_mode<synchronous>, transform_indices = @transform_2, window_bounds = array<i64: 128, 384>}, {pipeline_mode = #tpu.pipeline_mode<synchronous>, transform_indices = @transform_3, window_bounds = array<i64: 1, 384>}, {transform_indices = @transform_4, window_bounds = array<i64: 8, 128>}]} {
    %c0_i32 = arith.constant 0 : i32
    %0 = arith.cmpi eq, %arg0, %c0_i32 : i32
    %1 = arith.extui %0 : i1 to i32
    %c0_i32_0 = arith.constant 0 : i32
    %2 = arith.cmpi ne, %1, %c0_i32_0 : i32
    scf.if %2 {
      %c0_64 = arith.constant 0 : index
      %c0_65 = arith.constant 0 : index
      %247 = vector.load %arg2[%c0_64, %c0_65] : memref<1x128xf32, #tpu.memory_space<vmem>>, vector<1x128xf32>
      %c0_66 = arith.constant 0 : index
      %c0_67 = arith.constant 0 : index
      %248 = vector.load %arg6[%c0_66, %c0_67] : memref<1x128xf32, #tpu.memory_space<vmem>>, vector<1x128xf32>
      tpu.vector_store %arg6[%c0_66, %c0_67], %247 {strides = array<i32>} : memref<1x128xf32, #tpu.memory_space<vmem>>, vector<1x128xf32>,
    } else {
    }
    %c0 = arith.constant 0 : index
    %c0_1 = arith.constant 0 : index
    %3 = vector.load %arg3[%c0, %c0_1] : memref<128x384xf32, #tpu.memory_space<vmem>>, vector<128x384xf32>
    %c0_2 = arith.constant 0 : index
    %c0_3 = arith.constant 0 : index
    %4 = vector.load %arg4[%c0_2, %c0_3] : memref<1x384xf32, #tpu.memory_space<vmem>>, vector<1x384xf32>
    %c0_4 = arith.constant 0 : index
    %c0_5 = arith.constant 0 : index
    %5 = vector.load %arg6[%c0_4, %c0_5] : memref<1x128xf32, #tpu.memory_space<vmem>>, vector<1x128xf32>
    %c0_6 = arith.constant 0 : index
    %c0_7 = arith.constant 0 : index
    %6 = vector.load %arg1[%c0_6, %c0_7] : memref<8x384xf32, #tpu.memory_space<vmem>>, vector<1x384xf32>
    %cst = arith.constant dense<0.000000e+00> : vector<1x384xf32>
    %7 = tpu.matmul %5, %3, %cst {dimension_numbers = #tpu.dot_dimension_numbers<[1], [0], [0], [1], [0, 0, 1, 1], [], []>} : vector<1x128xf32>, vector<128x384xf32>, vector<1x384xf32> -> vector<1x384xf32>
    %8 = arith.addf %7, %4 : vector<1x384xf32>
    %9 = vector.extract_strided_slice %6 {offsets = [0, 0], sizes = [1, 128], strides = [1, 1]} : vector<1x384xf32> to vector<1x128xf32>
    %10 = vector.extract_strided_slice %8 {offsets = [0, 0], sizes = [1, 128], strides = [1, 1]} : vector<1x384xf32> to vector<1x128xf32>
    %11 = arith.addf %9, %10 : vector<1x128xf32>
    %12 = arith.negf %11 : vector<1x128xf32>
    %13 = math.exp %12 : vector<1x128xf32>
    %cst_8 = arith.constant 1.000000e+00 : f32
    %14 = vector.broadcast %cst_8 : f32 to vector<1x128xf32>
    %15 = arith.addf %14, %13 : vector<1x128xf32>
    %16 = arith.divf %14, %15 : vector<1x128xf32>
    %17 = vector.extract_strided_slice %6 {offsets = [0, 128], sizes = [1, 128], strides = [1, 1]} : vector<1x384xf32> to vector<1x128xf32>
    %18 = vector.extract_strided_slice %8 {offsets = [0, 128], sizes = [1, 128], strides = [1, 1]} : vector<1x384xf32> to vector<1x128xf32>
    %19 = arith.addf %17, %18 : vector<1x128xf32>
    %20 = arith.negf %19 : vector<1x128xf32>
    %21 = math.exp %20 : vector<1x128xf32>
    %cst_9 = arith.constant 1.000000e+00 : f32
    %22 = vector.broadcast %cst_9 : f32 to vector<1x128xf32>
    %23 = arith.addf %22, %21 : vector<1x128xf32>
    %24 = arith.divf %22, %23 : vector<1x128xf32>
    %25 = vector.extract_strided_slice %6 {offsets = [0, 256], sizes = [1, 128], strides = [1, 1]} : vector<1x384xf32> to vector<1x128xf32>
    %26 = vector.extract_strided_slice %8 {offsets = [0, 256], sizes = [1, 128], strides = [1, 1]} : vector<1x384xf32> to vector<1x128xf32>
    %27 = arith.mulf %16, %26 : vector<1x128xf32>
    %28 = arith.addf %25, %27 : vector<1x128xf32>
    %29 = math.tanh %28 : vector<1x128xf32>
    %cst_10 = arith.constant 1.000000e+00 : f32
    %30 = vector.broadcast %cst_10 : f32 to vector<1x128xf32>
    %31 = arith.subf %30, %24 : vector<1x128xf32>
    %32 = arith.mulf %31, %29 : vector<1x128xf32>
    %33 = arith.mulf %24, %5 : vector<1x128xf32>
    %34 = arith.addf %32, %33 : vector<1x128xf32>
    %c0_11 = arith.constant 0 : index
    %c0_12 = arith.constant 0 : index
    %35 = vector.load %arg5[%c0_11, %c0_12] : memref<8x128xf32, #tpu.memory_space<vmem>>, vector<1x128xf32>
    tpu.vector_store %arg5[%c0_11, %c0_12], %34 {strides = array<i32>} : memref<8x128xf32, #tpu.memory_space<vmem>>, vector<1x128xf32>,
    %c1 = arith.constant 1 : index
    %c0_13 = arith.constant 0 : index
    %36 = vector.load %arg1[%c1, %c0_13] : memref<8x384xf32, #tpu.memory_space<vmem>>, vector<1x384xf32>
    %cst_14 = arith.constant dense<0.000000e+00> : vector<1x384xf32>
    %37 = tpu.matmul %34, %3, %cst_14 {dimension_numbers = #tpu.dot_dimension_numbers<[1], [0], [0], [1], [0, 0, 1, 1], [], []>} : vector<1x128xf32>, vector<128x384xf32>, vector<1x384xf32> -> vector<1x384xf32>
    %38 = arith.addf %37, %4 : vector<1x384xf32>
    %39 = vector.extract_strided_slice %36 {offsets = [0, 0], sizes = [1, 128], strides = [1, 1]} : vector<1x384xf32> to vector<1x128xf32>
    %40 = vector.extract_strided_slice %38 {offsets = [0, 0], sizes = [1, 128], strides = [1, 1]} : vector<1x384xf32> to vector<1x128xf32>
    %41 = arith.addf %39, %40 : vector<1x128xf32>
    %42 = arith.negf %41 : vector<1x128xf32>
    %43 = math.exp %42 : vector<1x128xf32>
    %cst_15 = arith.constant 1.000000e+00 : f32
    %44 = vector.broadcast %cst_15 : f32 to vector<1x128xf32>
    %45 = arith.addf %44, %43 : vector<1x128xf32>
    %46 = arith.divf %44, %45 : vector<1x128xf32>
    %47 = vector.extract_strided_slice %36 {offsets = [0, 128], sizes = [1, 128], strides = [1, 1]} : vector<1x384xf32> to vector<1x128xf32>
    %48 = vector.extract_strided_slice %38 {offsets = [0, 128], sizes = [1, 128], strides = [1, 1]} : vector<1x384xf32> to vector<1x128xf32>
    %49 = arith.addf %47, %48 : vector<1x128xf32>
    %50 = arith.negf %49 : vector<1x128xf32>
    %51 = math.exp %50 : vector<1x128xf32>
    %cst_16 = arith.constant 1.000000e+00 : f32
    %52 = vector.broadcast %cst_16 : f32 to vector<1x128xf32>
    %53 = arith.addf %52, %51 : vector<1x128xf32>
    %54 = arith.divf %52, %53 : vector<1x128xf32>
    %55 = vector.extract_strided_slice %36 {offsets = [0, 256], sizes = [1, 128], strides = [1, 1]} : vector<1x384xf32> to vector<1x128xf32>
    %56 = vector.extract_strided_slice %38 {offsets = [0, 256], sizes = [1, 128], strides = [1, 1]} : vector<1x384xf32> to vector<1x128xf32>
    %57 = arith.mulf %46, %56 : vector<1x128xf32>
    %58 = arith.addf %55, %57 : vector<1x128xf32>
    %59 = math.tanh %58 : vector<1x128xf32>
    %cst_17 = arith.constant 1.000000e+00 : f32
    %60 = vector.broadcast %cst_17 : f32 to vector<1x128xf32>
    %61 = arith.subf %60, %54 : vector<1x128xf32>
    %62 = arith.mulf %61, %59 : vector<1x128xf32>
    %63 = arith.mulf %54, %34 : vector<1x128xf32>
    %64 = arith.addf %62, %63 : vector<1x128xf32>
    %c1_18 = arith.constant 1 : index
    %c0_19 = arith.constant 0 : index
    %65 = vector.load %arg5[%c1_18, %c0_19] : memref<8x128xf32, #tpu.memory_space<vmem>>, vector<1x128xf32>
    tpu.vector_store %arg5[%c1_18, %c0_19], %64 {strides = array<i32>} : memref<8x128xf32, #tpu.memory_space<vmem>>, vector<1x128xf32>,
    %c2 = arith.constant 2 : index
    %c0_20 = arith.constant 0 : index
    %66 = vector.load %arg1[%c2, %c0_20] : memref<8x384xf32, #tpu.memory_space<vmem>>, vector<1x384xf32>
    %cst_21 = arith.constant dense<0.000000e+00> : vector<1x384xf32>
    %67 = tpu.matmul %64, %3, %cst_21 {dimension_numbers = #tpu.dot_dimension_numbers<[1], [0], [0], [1], [0, 0, 1, 1], [], []>} : vector<1x128xf32>, vector<128x384xf32>, vector<1x384xf32> -> vector<1x384xf32>
    %68 = arith.addf %67, %4 : vector<1x384xf32>
    %69 = vector.extract_strided_slice %66 {offsets = [0, 0], sizes = [1, 128], strides = [1, 1]} : vector<1x384xf32> to vector<1x128xf32>
    %70 = vector.extract_strided_slice %68 {offsets = [0, 0], sizes = [1, 128], strides = [1, 1]} : vector<1x384xf32> to vector<1x128xf32>
    %71 = arith.addf %69, %70 : vector<1x128xf32>
    %72 = arith.negf %71 : vector<1x128xf32>
    %73 = math.exp %72 : vector<1x128xf32>
    %cst_22 = arith.constant 1.000000e+00 : f32
    %74 = vector.broadcast %cst_22 : f32 to vector<1x128xf32>
    %75 = arith.addf %74, %73 : vector<1x128xf32>
    %76 = arith.divf %74, %75 : vector<1x128xf32>
    %77 = vector.extract_strided_slice %66 {offsets = [0, 128], sizes = [1, 128], strides = [1, 1]} : vector<1x384xf32> to vector<1x128xf32>
    %78 = vector.extract_strided_slice %68 {offsets = [0, 128], sizes = [1, 128], strides = [1, 1]} : vector<1x384xf32> to vector<1x128xf32>
    %79 = arith.addf %77, %78 : vector<1x128xf32>
    %80 = arith.negf %79 : vector<1x128xf32>
    %81 = math.exp %80 : vector<1x128xf32>
    %cst_23 = arith.constant 1.000000e+00 : f32
    %82 = vector.broadcast %cst_23 : f32 to vector<1x128xf32>
    %83 = arith.addf %82, %81 : vector<1x128xf32>
    %84 = arith.divf %82, %83 : vector<1x128xf32>
    %85 = vector.extract_strided_slice %66 {offsets = [0, 256], sizes = [1, 128], strides = [1, 1]} : vector<1x384xf32> to vector<1x128xf32>
    %86 = vector.extract_strided_slice %68 {offsets = [0, 256], sizes = [1, 128], strides = [1, 1]} : vector<1x384xf32> to vector<1x128xf32>
    %87 = arith.mulf %76, %86 : vector<1x128xf32>
    %88 = arith.addf %85, %87 : vector<1x128xf32>
    %89 = math.tanh %88 : vector<1x128xf32>
    %cst_24 = arith.constant 1.000000e+00 : f32
    %90 = vector.broadcast %cst_24 : f32 to vector<1x128xf32>
    %91 = arith.subf %90, %84 : vector<1x128xf32>
    %92 = arith.mulf %91, %89 : vector<1x128xf32>
    %93 = arith.mulf %84, %64 : vector<1x128xf32>
    %94 = arith.addf %92, %93 : vector<1x128xf32>
    %c2_25 = arith.constant 2 : index
    %c0_26 = arith.constant 0 : index
    %95 = vector.load %arg5[%c2_25, %c0_26] : memref<8x128xf32, #tpu.memory_space<vmem>>, vector<1x128xf32>
    tpu.vector_store %arg5[%c2_25, %c0_26], %94 {strides = array<i32>} : memref<8x128xf32, #tpu.memory_space<vmem>>, vector<1x128xf32>,
    %c3 = arith.constant 3 : index
    %c0_27 = arith.constant 0 : index
    %96 = vector.load %arg1[%c3, %c0_27] : memref<8x384xf32, #tpu.memory_space<vmem>>, vector<1x384xf32>
    %cst_28 = arith.constant dense<0.000000e+00> : vector<1x384xf32>
    %97 = tpu.matmul %94, %3, %cst_28 {dimension_numbers = #tpu.dot_dimension_numbers<[1], [0], [0], [1], [0, 0, 1, 1], [], []>} : vector<1x128xf32>, vector<128x384xf32>, vector<1x384xf32> -> vector<1x384xf32>
    %98 = arith.addf %97, %4 : vector<1x384xf32>
    %99 = vector.extract_strided_slice %96 {offsets = [0, 0], sizes = [1, 128], strides = [1, 1]} : vector<1x384xf32> to vector<1x128xf32>
    %100 = vector.extract_strided_slice %98 {offsets = [0, 0], sizes = [1, 128], strides = [1, 1]} : vector<1x384xf32> to vector<1x128xf32>
    %101 = arith.addf %99, %100 : vector<1x128xf32>
    %102 = arith.negf %101 : vector<1x128xf32>
    %103 = math.exp %102 : vector<1x128xf32>
    %cst_29 = arith.constant 1.000000e+00 : f32
    %104 = vector.broadcast %cst_29 : f32 to vector<1x128xf32>
    %105 = arith.addf %104, %103 : vector<1x128xf32>
    %106 = arith.divf %104, %105 : vector<1x128xf32>
    %107 = vector.extract_strided_slice %96 {offsets = [0, 128], sizes = [1, 128], strides = [1, 1]} : vector<1x384xf32> to vector<1x128xf32>
    %108 = vector.extract_strided_slice %98 {offsets = [0, 128], sizes = [1, 128], strides = [1, 1]} : vector<1x384xf32> to vector<1x128xf32>
    %109 = arith.addf %107, %108 : vector<1x128xf32>
    %110 = arith.negf %109 : vector<1x128xf32>
    %111 = math.exp %110 : vector<1x128xf32>
    %cst_30 = arith.constant 1.000000e+00 : f32
    %112 = vector.broadcast %cst_30 : f32 to vector<1x128xf32>
    %113 = arith.addf %112, %111 : vector<1x128xf32>
    %114 = arith.divf %112, %113 : vector<1x128xf32>
    %115 = vector.extract_strided_slice %96 {offsets = [0, 256], sizes = [1, 128], strides = [1, 1]} : vector<1x384xf32> to vector<1x128xf32>
    %116 = vector.extract_strided_slice %98 {offsets = [0, 256], sizes = [1, 128], strides = [1, 1]} : vector<1x384xf32> to vector<1x128xf32>
    %117 = arith.mulf %106, %116 : vector<1x128xf32>
    %118 = arith.addf %115, %117 : vector<1x128xf32>
    %119 = math.tanh %118 : vector<1x128xf32>
    %cst_31 = arith.constant 1.000000e+00 : f32
    %120 = vector.broadcast %cst_31 : f32 to vector<1x128xf32>
    %121 = arith.subf %120, %114 : vector<1x128xf32>
    %122 = arith.mulf %121, %119 : vector<1x128xf32>
    %123 = arith.mulf %114, %94 : vector<1x128xf32>
    %124 = arith.addf %122, %123 : vector<1x128xf32>
    %c3_32 = arith.constant 3 : index
    %c0_33 = arith.constant 0 : index
    %125 = vector.load %arg5[%c3_32, %c0_33] : memref<8x128xf32, #tpu.memory_space<vmem>>, vector<1x128xf32>
    tpu.vector_store %arg5[%c3_32, %c0_33], %124 {strides = array<i32>} : memref<8x128xf32, #tpu.memory_space<vmem>>, vector<1x128xf32>,
    %c4 = arith.constant 4 : index
    %c0_34 = arith.constant 0 : index
    %126 = vector.load %arg1[%c4, %c0_34] : memref<8x384xf32, #tpu.memory_space<vmem>>, vector<1x384xf32>
    %cst_35 = arith.constant dense<0.000000e+00> : vector<1x384xf32>
    %127 = tpu.matmul %124, %3, %cst_35 {dimension_numbers = #tpu.dot_dimension_numbers<[1], [0], [0], [1], [0, 0, 1, 1], [], []>} : vector<1x128xf32>, vector<128x384xf32>, vector<1x384xf32> -> vector<1x384xf32>
    %128 = arith.addf %127, %4 : vector<1x384xf32>
    %129 = vector.extract_strided_slice %126 {offsets = [0, 0], sizes = [1, 128], strides = [1, 1]} : vector<1x384xf32> to vector<1x128xf32>
    %130 = vector.extract_strided_slice %128 {offsets = [0, 0], sizes = [1, 128], strides = [1, 1]} : vector<1x384xf32> to vector<1x128xf32>
    %131 = arith.addf %129, %130 : vector<1x128xf32>
    %132 = arith.negf %131 : vector<1x128xf32>
    %133 = math.exp %132 : vector<1x128xf32>
    %cst_36 = arith.constant 1.000000e+00 : f32
    %134 = vector.broadcast %cst_36 : f32 to vector<1x128xf32>
    %135 = arith.addf %134, %133 : vector<1x128xf32>
    %136 = arith.divf %134, %135 : vector<1x128xf32>
    %137 = vector.extract_strided_slice %126 {offsets = [0, 128], sizes = [1, 128], strides = [1, 1]} : vector<1x384xf32> to vector<1x128xf32>
    %138 = vector.extract_strided_slice %128 {offsets = [0, 128], sizes = [1, 128], strides = [1, 1]} : vector<1x384xf32> to vector<1x128xf32>
    %139 = arith.addf %137, %138 : vector<1x128xf32>
    %140 = arith.negf %139 : vector<1x128xf32>
    %141 = math.exp %140 : vector<1x128xf32>
    %cst_37 = arith.constant 1.000000e+00 : f32
    %142 = vector.broadcast %cst_37 : f32 to vector<1x128xf32>
    %143 = arith.addf %142, %141 : vector<1x128xf32>
    %144 = arith.divf %142, %143 : vector<1x128xf32>
    %145 = vector.extract_strided_slice %126 {offsets = [0, 256], sizes = [1, 128], strides = [1, 1]} : vector<1x384xf32> to vector<1x128xf32>
    %146 = vector.extract_strided_slice %128 {offsets = [0, 256], sizes = [1, 128], strides = [1, 1]} : vector<1x384xf32> to vector<1x128xf32>
    %147 = arith.mulf %136, %146 : vector<1x128xf32>
    %148 = arith.addf %145, %147 : vector<1x128xf32>
    %149 = math.tanh %148 : vector<1x128xf32>
    %cst_38 = arith.constant 1.000000e+00 : f32
    %150 = vector.broadcast %cst_38 : f32 to vector<1x128xf32>
    %151 = arith.subf %150, %144 : vector<1x128xf32>
    %152 = arith.mulf %151, %149 : vector<1x128xf32>
    %153 = arith.mulf %144, %124 : vector<1x128xf32>
    %154 = arith.addf %152, %153 : vector<1x128xf32>
    %c4_39 = arith.constant 4 : index
    %c0_40 = arith.constant 0 : index
    %155 = vector.load %arg5[%c4_39, %c0_40] : memref<8x128xf32, #tpu.memory_space<vmem>>, vector<1x128xf32>
    tpu.vector_store %arg5[%c4_39, %c0_40], %154 {strides = array<i32>} : memref<8x128xf32, #tpu.memory_space<vmem>>, vector<1x128xf32>,
    %c5 = arith.constant 5 : index
    %c0_41 = arith.constant 0 : index
    %156 = vector.load %arg1[%c5, %c0_41] : memref<8x384xf32, #tpu.memory_space<vmem>>, vector<1x384xf32>
    %cst_42 = arith.constant dense<0.000000e+00> : vector<1x384xf32>
    %157 = tpu.matmul %154, %3, %cst_42 {dimension_numbers = #tpu.dot_dimension_numbers<[1], [0], [0], [1], [0, 0, 1, 1], [], []>} : vector<1x128xf32>, vector<128x384xf32>, vector<1x384xf32> -> vector<1x384xf32>
    %158 = arith.addf %157, %4 : vector<1x384xf32>
    %159 = vector.extract_strided_slice %156 {offsets = [0, 0], sizes = [1, 128], strides = [1, 1]} : vector<1x384xf32> to vector<1x128xf32>
    %160 = vector.extract_strided_slice %158 {offsets = [0, 0], sizes = [1, 128], strides = [1, 1]} : vector<1x384xf32> to vector<1x128xf32>
    %161 = arith.addf %159, %160 : vector<1x128xf32>
    %162 = arith.negf %161 : vector<1x128xf32>
    %163 = math.exp %162 : vector<1x128xf32>
    %cst_43 = arith.constant 1.000000e+00 : f32
    %164 = vector.broadcast %cst_43 : f32 to vector<1x128xf32>
    %165 = arith.addf %164, %163 : vector<1x128xf32>
    %166 = arith.divf %164, %165 : vector<1x128xf32>
    %167 = vector.extract_strided_slice %156 {offsets = [0, 128], sizes = [1, 128], strides = [1, 1]} : vector<1x384xf32> to vector<1x128xf32>
    %168 = vector.extract_strided_slice %158 {offsets = [0, 128], sizes = [1, 128], strides = [1, 1]} : vector<1x384xf32> to vector<1x128xf32>
    %169 = arith.addf %167, %168 : vector<1x128xf32>
    %170 = arith.negf %169 : vector<1x128xf32>
    %171 = math.exp %170 : vector<1x128xf32>
    %cst_44 = arith.constant 1.000000e+00 : f32
    %172 = vector.broadcast %cst_44 : f32 to vector<1x128xf32>
    %173 = arith.addf %172, %171 : vector<1x128xf32>
    %174 = arith.divf %172, %173 : vector<1x128xf32>
    %175 = vector.extract_strided_slice %156 {offsets = [0, 256], sizes = [1, 128], strides = [1, 1]} : vector<1x384xf32> to vector<1x128xf32>
    %176 = vector.extract_strided_slice %158 {offsets = [0, 256], sizes = [1, 128], strides = [1, 1]} : vector<1x384xf32> to vector<1x128xf32>
    %177 = arith.mulf %166, %176 : vector<1x128xf32>
    %178 = arith.addf %175, %177 : vector<1x128xf32>
    %179 = math.tanh %178 : vector<1x128xf32>
    %cst_45 = arith.constant 1.000000e+00 : f32
    %180 = vector.broadcast %cst_45 : f32 to vector<1x128xf32>
    %181 = arith.subf %180, %174 : vector<1x128xf32>
    %182 = arith.mulf %181, %179 : vector<1x128xf32>
    %183 = arith.mulf %174, %154 : vector<1x128xf32>
    %184 = arith.addf %182, %183 : vector<1x128xf32>
    %c5_46 = arith.constant 5 : index
    %c0_47 = arith.constant 0 : index
    %185 = vector.load %arg5[%c5_46, %c0_47] : memref<8x128xf32, #tpu.memory_space<vmem>>, vector<1x128xf32>
    tpu.vector_store %arg5[%c5_46, %c0_47], %184 {strides = array<i32>} : memref<8x128xf32, #tpu.memory_space<vmem>>, vector<1x128xf32>,
    %c6 = arith.constant 6 : index
    %c0_48 = arith.constant 0 : index
    %186 = vector.load %arg1[%c6, %c0_48] : memref<8x384xf32, #tpu.memory_space<vmem>>, vector<1x384xf32>
    %cst_49 = arith.constant dense<0.000000e+00> : vector<1x384xf32>
    %187 = tpu.matmul %184, %3, %cst_49 {dimension_numbers = #tpu.dot_dimension_numbers<[1], [0], [0], [1], [0, 0, 1, 1], [], []>} : vector<1x128xf32>, vector<128x384xf32>, vector<1x384xf32> -> vector<1x384xf32>
    %188 = arith.addf %187, %4 : vector<1x384xf32>
    %189 = vector.extract_strided_slice %186 {offsets = [0, 0], sizes = [1, 128], strides = [1, 1]} : vector<1x384xf32> to vector<1x128xf32>
    %190 = vector.extract_strided_slice %188 {offsets = [0, 0], sizes = [1, 128], strides = [1, 1]} : vector<1x384xf32> to vector<1x128xf32>
    %191 = arith.addf %189, %190 : vector<1x128xf32>
    %192 = arith.negf %191 : vector<1x128xf32>
    %193 = math.exp %192 : vector<1x128xf32>
    %cst_50 = arith.constant 1.000000e+00 : f32
    %194 = vector.broadcast %cst_50 : f32 to vector<1x128xf32>
    %195 = arith.addf %194, %193 : vector<1x128xf32>
    %196 = arith.divf %194, %195 : vector<1x128xf32>
    %197 = vector.extract_strided_slice %186 {offsets = [0, 128], sizes = [1, 128], strides = [1, 1]} : vector<1x384xf32> to vector<1x128xf32>
    %198 = vector.extract_strided_slice %188 {offsets = [0, 128], sizes = [1, 128], strides = [1, 1]} : vector<1x384xf32> to vector<1x128xf32>
    %199 = arith.addf %197, %198 : vector<1x128xf32>
    %200 = arith.negf %199 : vector<1x128xf32>
    %201 = math.exp %200 : vector<1x128xf32>
    %cst_51 = arith.constant 1.000000e+00 : f32
    %202 = vector.broadcast %cst_51 : f32 to vector<1x128xf32>
    %203 = arith.addf %202, %201 : vector<1x128xf32>
    %204 = arith.divf %202, %203 : vector<1x128xf32>
    %205 = vector.extract_strided_slice %186 {offsets = [0, 256], sizes = [1, 128], strides = [1, 1]} : vector<1x384xf32> to vector<1x128xf32>
    %206 = vector.extract_strided_slice %188 {offsets = [0, 256], sizes = [1, 128], strides = [1, 1]} : vector<1x384xf32> to vector<1x128xf32>
    %207 = arith.mulf %196, %206 : vector<1x128xf32>
    %208 = arith.addf %205, %207 : vector<1x128xf32>
    %209 = math.tanh %208 : vector<1x128xf32>
    %cst_52 = arith.constant 1.000000e+00 : f32
    %210 = vector.broadcast %cst_52 : f32 to vector<1x128xf32>
    %211 = arith.subf %210, %204 : vector<1x128xf32>
    %212 = arith.mulf %211, %209 : vector<1x128xf32>
    %213 = arith.mulf %204, %184 : vector<1x128xf32>
    %214 = arith.addf %212, %213 : vector<1x128xf32>
    %c6_53 = arith.constant 6 : index
    %c0_54 = arith.constant 0 : index
    %215 = vector.load %arg5[%c6_53, %c0_54] : memref<8x128xf32, #tpu.memory_space<vmem>>, vector<1x128xf32>
    tpu.vector_store %arg5[%c6_53, %c0_54], %214 {strides = array<i32>} : memref<8x128xf32, #tpu.memory_space<vmem>>, vector<1x128xf32>,
    %c7 = arith.constant 7 : index
    %c0_55 = arith.constant 0 : index
    %216 = vector.load %arg1[%c7, %c0_55] : memref<8x384xf32, #tpu.memory_space<vmem>>, vector<1x384xf32>
    %cst_56 = arith.constant dense<0.000000e+00> : vector<1x384xf32>
    %217 = tpu.matmul %214, %3, %cst_56 {dimension_numbers = #tpu.dot_dimension_numbers<[1], [0], [0], [1], [0, 0, 1, 1], [], []>} : vector<1x128xf32>, vector<128x384xf32>, vector<1x384xf32> -> vector<1x384xf32>
    %218 = arith.addf %217, %4 : vector<1x384xf32>
    %219 = vector.extract_strided_slice %216 {offsets = [0, 0], sizes = [1, 128], strides = [1, 1]} : vector<1x384xf32> to vector<1x128xf32>
    %220 = vector.extract_strided_slice %218 {offsets = [0, 0], sizes = [1, 128], strides = [1, 1]} : vector<1x384xf32> to vector<1x128xf32>
    %221 = arith.addf %219, %220 : vector<1x128xf32>
    %222 = arith.negf %221 : vector<1x128xf32>
    %223 = math.exp %222 : vector<1x128xf32>
    %cst_57 = arith.constant 1.000000e+00 : f32
    %224 = vector.broadcast %cst_57 : f32 to vector<1x128xf32>
    %225 = arith.addf %224, %223 : vector<1x128xf32>
    %226 = arith.divf %224, %225 : vector<1x128xf32>
    %227 = vector.extract_strided_slice %216 {offsets = [0, 128], sizes = [1, 128], strides = [1, 1]} : vector<1x384xf32> to vector<1x128xf32>
    %228 = vector.extract_strided_slice %218 {offsets = [0, 128], sizes = [1, 128], strides = [1, 1]} : vector<1x384xf32> to vector<1x128xf32>
    %229 = arith.addf %227, %228 : vector<1x128xf32>
    %230 = arith.negf %229 : vector<1x128xf32>
    %231 = math.exp %230 : vector<1x128xf32>
    %cst_58 = arith.constant 1.000000e+00 : f32
    %232 = vector.broadcast %cst_58 : f32 to vector<1x128xf32>
    %233 = arith.addf %232, %231 : vector<1x128xf32>
    %234 = arith.divf %232, %233 : vector<1x128xf32>
    %235 = vector.extract_strided_slice %216 {offsets = [0, 256], sizes = [1, 128], strides = [1, 1]} : vector<1x384xf32> to vector<1x128xf32>
    %236 = vector.extract_strided_slice %218 {offsets = [0, 256], sizes = [1, 128], strides = [1, 1]} : vector<1x384xf32> to vector<1x128xf32>
    %237 = arith.mulf %226, %236 : vector<1x128xf32>
    %238 = arith.addf %235, %237 : vector<1x128xf32>
    %239 = math.tanh %238 : vector<1x128xf32>
    %cst_59 = arith.constant 1.000000e+00 : f32
    %240 = vector.broadcast %cst_59 : f32 to vector<1x128xf32>
    %241 = arith.subf %240, %234 : vector<1x128xf32>
    %242 = arith.mulf %241, %239 : vector<1x128xf32>
    %243 = arith.mulf %234, %214 : vector<1x128xf32>
    %244 = arith.addf %242, %243 : vector<1x128xf32>
    %c7_60 = arith.constant 7 : index
    %c0_61 = arith.constant 0 : index
    %245 = vector.load %arg5[%c7_60, %c0_61] : memref<8x128xf32, #tpu.memory_space<vmem>>, vector<1x128xf32>
    tpu.vector_store %arg5[%c7_60, %c0_61], %244 {strides = array<i32>} : memref<8x128xf32, #tpu.memory_space<vmem>>, vector<1x128xf32>,
    %c0_62 = arith.constant 0 : index
    %c0_63 = arith.constant 0 : index
    %246 = vector.load %arg6[%c0_62, %c0_63] : memref<1x128xf32, #tpu.memory_space<vmem>>, vector<1x128xf32>
    tpu.vector_store %arg6[%c0_62, %c0_63], %244 {strides = array<i32>} : memref<1x128xf32, #tpu.memory_space<vmem>>, vector<1x128xf32>,
    return
  }
  func.func @transform_0(%arg0: i32) -> (i32, i32) {
    %c0_i32 = arith.constant 0 : i32
    %c0_i32_0 = arith.constant 0 : i32
    return %arg0, %c0_i32 : i32, i32
  }
  func.func @transform_1(%arg0: i32) -> (i32, i32) {
    %c0_i32 = arith.constant 0 : i32
    %c0_i32_0 = arith.constant 0 : i32
    %c0_i32_1 = arith.constant 0 : i32
    return %c0_i32, %c0_i32_0 : i32, i32
  }
  func.func @transform_2(%arg0: i32) -> (i32, i32) {
    %c0_i32 = arith.constant 0 : i32
    %c0_i32_0 = arith.constant 0 : i32
    %c0_i32_1 = arith.constant 0 : i32
    return %c0_i32, %c0_i32_0 : i32, i32
  }
  func.func @transform_3(%arg0: i32) -> (i32, i32) {
    %c0_i32 = arith.constant 0 : i32
    %c0_i32_0 = arith.constant 0 : i32
    %c0_i32_1 = arith.constant 0 : i32
    return %c0_i32, %c0_i32_0 : i32, i32
  }
  func.func @transform_4(%arg0: i32) -> (i32, i32) {
    %c0_i32 = arith.constant 0 : i32
    %c0_i32_0 = arith.constant 0 : i32
    return %arg0, %c0_i32 : i32, i32
  }
}

</mosaic_0001>

<llo_original>
// kernel: tpu_custom_call.1
$region0: #{tpu_custom_call.1}
  #allocation0 [shape = 'u32[]', space=smem, size = 0x4, offset = 0x4, fixed_abs, tag = 'smem constant byte address 0x4 - core index']
  #allocation1 [shape = 'u32[72,128]{1,0:T(1,128)}', space=vmem, size = 0x9000, scoped, tag = 'internal scratch']
  #allocation2 [shape = 'f32[1,128]{1,0:T(1,128)}', space=vmem, size = 0x200, scoped, tag = 'scratch operand']
  %s0 = inlined_call_operand.hbm [shape: f32[8,384], index: 0, kind: input, shape index: {}]
  %s1 = inlined_call_operand.hbm [shape: f32[1,128], index: 1, kind: input, shape index: {}]
  %s2 = inlined_call_operand.hbm [shape: f32[128,384], index: 2, kind: input, shape index: {}]
  %s3 = inlined_call_operand.hbm [shape: f32[1,384], index: 3, kind: input, shape index: {}]
  %s4 = inlined_call_operand.hbm [shape: f32[8,128], index: 4, kind: output, shape index: {}]
  %s5 = sld [smem:[#allocation0]]
  $region46: #{tpu_custom_call.1} parent=0
    _
  %s7 = ssub.s32 1, %s5
  %s8 = scalar_select 0, %s7, %s5
  $region1: #{tpu_custom_call.1} parent=0
    #allocation3 [shape = 'u8[12288]{0}', space=vmem, size = 0x3000, scoped, tag = 'input window, operand 0, single buffered']
    #allocation4 [shape = 's32[1]{0}', space=sflag, size = 0x4, scoped, tag = 'scoped memory for tpu_custom_call.1']
    #allocation5 [shape = 's32[1]{0}', space=sflag, size = 0x4, scoped, tag = 'scoped memory for tpu_custom_call.1']
    #allocation6 [shape = 'u8[512]{0}', space=vmem, size = 0x400, scoped, tag = 'input window, operand 1, single buffered']
    #allocation7 [shape = 's32[1]{0}', space=sflag, size = 0x4, scoped, tag = 'scoped memory for tpu_custom_call.1']
    #allocation8 [shape = 'u8[196608]{0}', space=vmem, size = 0x30000, scoped, tag = 'input window, operand 2, single buffered']
    #allocation9 [shape = 'u8[1536]{0}', space=vmem, size = 0x800, scoped, tag = 'input window, operand 3, single buffered']
    #allocation10 [shape = 's32[1]{0}', space=sflag, size = 0x4, scoped, tag = 'scoped memory for tpu_custom_call.1']
    #allocation11 [shape = 'u8[4096]{0}', space=vmem, size = 0x1000, scoped, tag = 'output window, operand 0, single buffered']
    %9 = vsyncpa [#allocation4], 0
    %10 = vsyncpa [#allocation7], 0
    %11 = vsyncpa [#allocation10], 0
    %12 = vsyncpa [#allocation5], 0
    // Predicated region
    $region2: #{tpu_custom_call.1} parent=1 // pred_check
      _
    $region3: #{tpu_custom_call.1} parent=1 // pred_check_branch
      %14 = sbr.rel (0) target = $region5
    $region4: #{tpu_custom_call.1} parent=1 // pred_region
      %16 = vsyncadd [#allocation4], 0
      %s18 = sshll.u32 %s0, 4
      %s19 = int_to_ptr.hbm [resolvable:$true] %s18
      %s20 = sshll.u32 [#allocation3], 4
      %s21 = int_to_ptr.vmem [resolvable:$true] %s20
      %23 = dma.hbm_to_vmem [thread:$0]  %s19, 384, %s21, [#allocation4]
    $region5: #{tpu_custom_call.1} parent=1 // pred_fallthru
      _
    // Predicated region
    $region6: #{tpu_custom_call.1} parent=1 // pred_check
      _
    $region7: #{tpu_custom_call.1} parent=1 // pred_check_branch
      %25 = sbr.rel (0) target = $region9
    $region8: #{tpu_custom_call.1} parent=1 // pred_region
      %27 = vsyncadd [#allocation7], 0
      %s29 = sshll.u32 %s1, 4
      %s30 = int_to_ptr.hbm [resolvable:$true] %s29
      %s31 = sshll.u32 [#allocation6], 4
      %s32 = int_to_ptr.vmem [resolvable:$true] %s31
      %34 = dma.hbm_to_vmem [thread:$0]  %s30, 16, %s32, [#allocation7]
    $region9: #{tpu_custom_call.1} parent=1 // pred_fallthru
      _
    // Predicated region
    $region10: #{tpu_custom_call.1} parent=1 // pred_check
      _
    $region11: #{tpu_custom_call.1} parent=1 // pred_check_branch
      %36 = sbr.rel (0) target = $region13
    $region12: #{tpu_custom_call.1} parent=1 // pred_region
      %38 = vsyncadd [#allocation7], 0
      %s39 = sshll.u32 %s2, 4
      %s40 = int_to_ptr.hbm [resolvable:$true] %s39
      %s41 = sshll.u32 [#allocation8], 4
      %s42 = int_to_ptr.vmem [resolvable:$true] %s41
      %47 = dma.hbm_to_vmem [thread:$0]  %s40, 6144, %s42, [#allocation7], 384, 384, 24
    $region13: #{tpu_custom_call.1} parent=1 // pred_fallthru
      _
    // Predicated region
    $region14: #{tpu_custom_call.1} parent=1 // pred_check
      _
    $region15: #{tpu_custom_call.1} parent=1 // pred_check_branch
      %49 = sbr.rel (0) target = $region17
    $region16: #{tpu_custom_call.1} parent=1 // pred_region
      %51 = vsyncadd [#allocation10], 0
      %s53 = sshll.u32 %s3, 4
      %s54 = int_to_ptr.hbm [resolvable:$true] %s53
      %s55 = sshll.u32 [#allocation9], 4
      %s56 = int_to_ptr.vmem [resolvable:$true] %s55
      %58 = dma.hbm_to_vmem [thread:$0]  %s54, 48, %s56, [#allocation10]
    $region17: #{tpu_custom_call.1} parent=1 // pred_fallthru
      _
    // Predicated region
    $region18: #{tpu_custom_call.1} parent=1 // pred_check
      _
    $region19: #{tpu_custom_call.1} parent=1 // pred_check_branch
      %60 = sbr.rel (0) target = $region21
    $region20: #{tpu_custom_call.1} parent=1 // pred_region
      %62 = dma.done [#allocation4], 384
    $region21: #{tpu_custom_call.1} parent=1 // pred_fallthru
      _
    // Predicated region
    $region22: #{tpu_custom_call.1} parent=1 // pred_check
      _
    $region23: #{tpu_custom_call.1} parent=1 // pred_check_branch
      %64 = sbr.rel (0) target = $region25
    $region24: #{tpu_custom_call.1} parent=1 // pred_region
      %66 = dma.done [#allocation7], 16
    $region25: #{tpu_custom_call.1} parent=1 // pred_fallthru
      _
    // Predicated region
    $region26: #{tpu_custom_call.1} parent=1 // pred_check
      _
    $region27: #{tpu_custom_call.1} parent=1 // pred_check_branch
      %68 = sbr.rel (0) target = $region29
    $region28: #{tpu_custom_call.1} parent=1 // pred_region
      %70 = dma.done [#allocation7], 6144
    $region29: #{tpu_custom_call.1} parent=1 // pred_fallthru
      _
    // Predicated region
    $region30: #{tpu_custom_call.1} parent=1 // pred_check
      _
    $region31: #{tpu_custom_call.1} parent=1 // pred_check_branch
      %72 = sbr.rel (0) target = $region33
    $region32: #{tpu_custom_call.1} parent=1 // pred_region
      %74 = dma.done [#allocation10], 48
    $region33: #{tpu_custom_call.1} parent=1 // pred_fallthru
      _
    %p75 = scmp.eq.s32.totalorder 0, 0
    // Predicated region
    $region34: #{tpu_custom_call.1} parent=1 // pred_check
      %p76 = pneg %p75
    $region35: #{tpu_custom_call.1} parent=1 // pred_check_branch
      %78 = sbr.rel (%p76) target = $region37
    $region36: #{tpu_custom_call.1} parent=1 // pred_region
      %v79 = vld [vmem:[#allocation6] sm:$0x1]
      %80 = vst [vmem:[#allocation2] sm:$0x1] %v79
    $region37: #{tpu_custom_call.1} parent=1 // pred_fallthru
      _
    %v81 = vld [vmem:[#allocation8] sm:$0xff]
    %v82 = vld [vmem:[#allocation8 + $0x8] sm:$0xff]
    %v83 = vld [vmem:[#allocation8 + $0x10] sm:$0xff]
    %v84 = vld [vmem:[#allocation8 + $0x18] sm:$0xff]
    %v85 = vld [vmem:[#allocation8 + $0x20] sm:$0xff]
    %v86 = vld [vmem:[#allocation8 + $0x28] sm:$0xff]
    %v87 = vld [vmem:[#allocation8 + $0x30] sm:$0xff]
    %v88 = vld [vmem:[#allocation8 + $0x38] sm:$0xff]
    %v89 = vld [vmem:[#allocation8 + $0x40] sm:$0xff]
    %v90 = vld [vmem:[#allocation8 + $0x48] sm:$0xff]
    %v91 = vld [vmem:[#allocation8 + $0x50] sm:$0xff]
    %v92 = vld [vmem:[#allocation8 + $0x58] sm:$0xff]
    %v93 = vld [vmem:[#allocation8 + $0x60] sm:$0xff]
    %v94 = vld [vmem:[#allocation8 + $0x68] sm:$0xff]
    %v95 = vld [vmem:[#allocation8 + $0x70] sm:$0xff]
    %v96 = vld [vmem:[#allocation8 + $0x78] sm:$0xff]
    %v97 = vld [vmem:[#allocation8 + $0x80] sm:$0xff]
    %v98 = vld [vmem:[#allocation8 + $0x88] sm:$0xff]
    %v99 = vld [vmem:[#allocation8 + $0x90] sm:$0xff]
    %v100 = vld [vmem:[#allocation8 + $0x98] sm:$0xff]
    %v101 = vld [vmem:[#allocation8 + $0xa0] sm:$0xff]
    %v102 = vld [vmem:[#allocation8 + $0xa8] sm:$0xff]
    %v103 = vld [vmem:[#allocation8 + $0xb0] sm:$0xff]
    %v104 = vld [vmem:[#allocation8 + $0xb8] sm:$0xff]
    %v105 = vld [vmem:[#allocation8 + $0xc0] sm:$0xff]
    %v106 = vld [vmem:[#allocation8 + $0xc8] sm:$0xff]
    %v107 = vld [vmem:[#allocation8 + $0xd0] sm:$0xff]
    %v108 = vld [vmem:[#allocation8 + $0xd8] sm:$0xff]
    %v109 = vld [vmem:[#allocation8 + $0xe0] sm:$0xff]
    %v110 = vld [vmem:[#allocation8 + $0xe8] sm:$0xff]
    %v111 = vld [vmem:[#allocation8 + $0xf0] sm:$0xff]
    %v112 = vld [vmem:[#allocation8 + $0xf8] sm:$0xff]
    %v113 = vld [vmem:[#allocation8 + $0x100] sm:$0xff]
    %v114 = vld [vmem:[#allocation8 + $0x108] sm:$0xff]
    %v115 = vld [vmem:[#allocation8 + $0x110] sm:$0xff]
    %v116 = vld [vmem:[#allocation8 + $0x118] sm:$0xff]
    %v117 = vld [vmem:[#allocation8 + $0x120] sm:$0xff]
    %v118 = vld [vmem:[#allocation8 + $0x128] sm:$0xff]
    %v119 = vld [vmem:[#allocation8 + $0x130] sm:$0xff]
    %v120 = vld [vmem:[#allocation8 + $0x138] sm:$0xff]
    %v121 = vld [vmem:[#allocation8 + $0x140] sm:$0xff]
    %v122 = vld [vmem:[#allocation8 + $0x148] sm:$0xff]
    %v123 = vld [vmem:[#allocation8 + $0x150] sm:$0xff]
    %v124 = vld [vmem:[#allocation8 + $0x158] sm:$0xff]
    %v125 = vld [vmem:[#allocation8 + $0x160] sm:$0xff]
    %v126 = vld [vmem:[#allocation8 + $0x168] sm:$0xff]
    %v127 = vld [vmem:[#allocation8 + $0x170] sm:$0xff]
    %v128 = vld [vmem:[#allocation8 + $0x178] sm:$0xff]
    %v129 = vld [vmem:[#allocation9] sm:$0x7]
    %v130 = vld [vmem:[#allocation2] sm:$0x1]
    %v131 = vld [vmem:[#allocation3] ss:$8 sm:$0x7]
    %v133 = vperm.slane %v129, 0
    %v134 = vperm.slane %v129, 1
    %v135 = vperm.slane %v129, 2
    %139 = vmatpush.msra.mxu0 %v126
    %140 = vmatpush.msra.mxu0 %v123
    %141 = vmatpush.msra.mxu0 %v120
    %142 = vmatpush.msra.mxu0 %v117
    %143 = vmatpush.msra.mxu0 %v114
    %144 = vmatpush.msra.mxu0 %v111
    %145 = vmatpush.msra.mxu0 %v108
    %146 = vmatpush.msra.mxu0 %v105
    %147 = vmatpush.msra.mxu0 %v102
    %148 = vmatpush.msra.mxu0 %v99
    %149 = vmatpush.msra.mxu0 %v96
    %150 = vmatpush.msra.mxu0 %v93
    %151 = vmatpush.msra.mxu0 %v90
    %152 = vmatpush.msra.mxu0 %v87
    %153 = vmatpush.msra.mxu0 %v84
    %154 = vmatpush.msra.mxu0 %v81
    %155 = vmatmul.f32.gmra.mxu0 %v130
    %v156 = vpop.f32.mrf.mxu0
    %v157 = vadd.f32 %v133, %v156
    %158 = vdwg.mxu0
    %159 = vmatpush.msra.mxu0 %v127
    %160 = vmatpush.msra.mxu0 %v124
    %161 = vmatpush.msra.mxu0 %v121
    %162 = vmatpush.msra.mxu0 %v118
    %163 = vmatpush.msra.mxu0 %v115
    %164 = vmatpush.msra.mxu0 %v112
    %165 = vmatpush.msra.mxu0 %v109
    %166 = vmatpush.msra.mxu0 %v106
    %167 = vmatpush.msra.mxu0 %v103
    %168 = vmatpush.msra.mxu0 %v100
    %169 = vmatpush.msra.mxu0 %v97
    %170 = vmatpush.msra.mxu0 %v94
    %171 = vmatpush.msra.mxu0 %v91
    %172 = vmatpush.msra.mxu0 %v88
    %173 = vmatpush.msra.mxu0 %v85
    %174 = vmatpush.msra.mxu0 %v82
    %175 = vmatmul.f32.gmra.mxu0 %v130
    %v176 = vpop.f32.mrf.mxu0
    %v177 = vadd.f32 %v134, %v176
    %178 = vdwg.mxu0
    %179 = vmatpush.msra.mxu0 %v128
    %180 = vmatpush.msra.mxu0 %v125
    %181 = vmatpush.msra.mxu0 %v122
    %182 = vmatpush.msra.mxu0 %v119
    %183 = vmatpush.msra.mxu0 %v116
    %184 = vmatpush.msra.mxu0 %v113
    %185 = vmatpush.msra.mxu0 %v110
    %186 = vmatpush.msra.mxu0 %v107
    %187 = vmatpush.msra.mxu0 %v104
    %188 = vmatpush.msra.mxu0 %v101
    %189 = vmatpush.msra.mxu0 %v98
    %190 = vmatpush.msra.mxu0 %v95
    %191 = vmatpush.msra.mxu0 %v92
    %192 = vmatpush.msra.mxu0 %v89
    %193 = vmatpush.msra.mxu0 %v86
    %194 = vmatpush.msra.mxu0 %v83
    %195 = vmatmul.f32.gmra.mxu0 %v130
    %v196 = vpop.f32.mrf.mxu0
    %v197 = vadd.f32 %v135, %v196
    %198 = vdwg.mxu0
    %v199 = vadd.f32 %v131, %v157
    %v200 = vxor.u32 %v199, 2147483648
    %v201 = vmul.f32 %v200, 1.442695
    %v202 = vpow.pop %v201
    %v203 = vadd.f32 %v202, 1.0
    %v204 = vrcp.pop %v203
    %v205 = vmul.f32 %v203, %v204
    %v206 = vsub.f32 1.0, %v205
    %v207 = vmul.f32 %v204, %v206
    %v208 = vadd.f32 %v204, %v207
    %vm209 = vweird.f32 %v203
    %vm210 = vweird.f32 %v204
    %vm211 = vmor %vm209, %vm210
    %v212 = vsel %vm211, %v204, %v208
    %v213 = vand.u32 2147483647, %v203
    %vm214 = vcmp.eq.f32.partialorder %v213, 8.507059e+37
    %v215 = vand.u32 %v203, 2147483648
    %v216 = vor.u32 1.1754944e-38, %v215
    %v217 = vsel %vm214, %v216, %v212
    %v218 = vmul.f32 1.0, %v217
    %v220 = vrot.slane %v131, 1
    %v222 = vadd.f32 %v220, %v177
    %v223 = vxor.u32 %v222, 2147483648
    %v224 = vmul.f32 %v223, 1.442695
    %v225 = vpow.pop %v224
    %v226 = vadd.f32 %v225, 1.0
    %v227 = vrcp.pop %v226
    %v228 = vmul.f32 %v226, %v227
    %v229 = vsub.f32 1.0, %v228
    %v230 = vmul.f32 %v227, %v229
    %v231 = vadd.f32 %v227, %v230
    %vm232 = vweird.f32 %v226
    %vm233 = vweird.f32 %v227
    %vm234 = vmor %vm232, %vm233
    %v235 = vsel %vm234, %v227, %v231
    %v236 = vand.u32 2147483647, %v226
    %vm237 = vcmp.eq.f32.partialorder %v236, 8.507059e+37
    %v238 = vand.u32 %v226, 2147483648
    %v239 = vor.u32 1.1754944e-38, %v238
    %v240 = vsel %vm237, %v239, %v235
    %v241 = vmul.f32 1.0, %v240
    %v242 = vmul.f32 %v218, %v197
    %v243 = vrot.slane %v131, 2
    %v245 = vadd.f32 %v243, %v242
    %v246 = vtanh.pop %v245
    %v247 = vsub.f32 1.0, %v241
    %v248 = vmul.f32 %v247, %v246
    %v249 = vmul.f32 %v241, %v130
    %v250 = vadd.f32 %v248, %v249
    %251 = vst [vmem:[#allocation11] sm:$0x1] %v250
    %s252 = scalar_lea.vmem [#allocation3], 1
    %v253 = vld [vmem:[%s252] ss:$8 sm:$0x7]
    %254 = vmatpush.msra.mxu0 %v126
    %255 = vmatpush.msra.mxu0 %v123
    %256 = vmatpush.msra.mxu0 %v120
    %257 = vmatpush.msra.mxu0 %v117
    %258 = vmatpush.msra.mxu0 %v114
    %259 = vmatpush.msra.mxu0 %v111
    %260 = vmatpush.msra.mxu0 %v108
    %261 = vmatpush.msra.mxu0 %v105
    %262 = vmatpush.msra.mxu0 %v102
    %263 = vmatpush.msra.mxu0 %v99
    %264 = vmatpush.msra.mxu0 %v96
    %265 = vmatpush.msra.mxu0 %v93
    %266 = vmatpush.msra.mxu0 %v90
    %267 = vmatpush.msra.mxu0 %v87
    %268 = vmatpush.msra.mxu0 %v84
    %269 = vmatpush.msra.mxu0 %v81
    %270 = vmatmul.f32.gmra.mxu0 %v250
    %v271 = vpop.f32.mrf.mxu0
    %v272 = vadd.f32 %v133, %v271
    %273 = vdwg.mxu0
    %274 = vmatpush.msra.mxu0 %v127
    %275 = vmatpush.msra.mxu0 %v124
    %276 = vmatpush.msra.mxu0 %v121
    %277 = vmatpush.msra.mxu0 %v118
    %278 = vmatpush.msra.mxu0 %v115
    %279 = vmatpush.msra.mxu0 %v112
    %280 = vmatpush.msra.mxu0 %v109
    %281 = vmatpush.msra.mxu0 %v106
    %282 = vmatpush.msra.mxu0 %v103
    %283 = vmatpush.msra.mxu0 %v100
    %284 = vmatpush.msra.mxu0 %v97
    %285 = vmatpush.msra.mxu0 %v94
    %286 = vmatpush.msra.mxu0 %v91
    %287 = vmatpush.msra.mxu0 %v88
    %288 = vmatpush.msra.mxu0 %v85
    %289 = vmatpush.msra.mxu0 %v82
    %290 = vmatmul.f32.gmra.mxu0 %v250
    %v291 = vpop.f32.mrf.mxu0
    %v292 = vadd.f32 %v134, %v291
    %293 = vdwg.mxu0
    %294 = vmatpush.msra.mxu0 %v128
    %295 = vmatpush.msra.mxu0 %v125
    %296 = vmatpush.msra.mxu0 %v122
    %297 = vmatpush.msra.mxu0 %v119
    %298 = vmatpush.msra.mxu0 %v116
    %299 = vmatpush.msra.mxu0 %v113
    %300 = vmatpush.msra.mxu0 %v110
    %301 = vmatpush.msra.mxu0 %v107
    %302 = vmatpush.msra.mxu0 %v104
    %303 = vmatpush.msra.mxu0 %v101
    %304 = vmatpush.msra.mxu0 %v98
    %305 = vmatpush.msra.mxu0 %v95
    %306 = vmatpush.msra.mxu0 %v92
    %307 = vmatpush.msra.mxu0 %v89
    %308 = vmatpush.msra.mxu0 %v86
    %309 = vmatpush.msra.mxu0 %v83
    %310 = vmatmul.f32.gmra.mxu0 %v250
    %v311 = vpop.f32.mrf.mxu0
    %v312 = vadd.f32 %v135, %v311
    %313 = vdwg.mxu0
    %v314 = vadd.f32 %v253, %v272
    %v315 = vxor.u32 %v314, 2147483648
    %v316 = vmul.f32 %v315, 1.442695
    %v317 = vpow.pop %v316
    %v318 = vadd.f32 %v317, 1.0
    %v319 = vrcp.pop %v318
    %v320 = vmul.f32 %v318, %v319
    %v321 = vsub.f32 1.0, %v320
    %v322 = vmul.f32 %v319, %v321
    %v323 = vadd.f32 %v319, %v322
    %vm324 = vweird.f32 %v318
    %vm325 = vweird.f32 %v319
    %vm326 = vmor %vm324, %vm325
    %v327 = vsel %vm326, %v319, %v323
    %v328 = vand.u32 2147483647, %v318
    %vm329 = vcmp.eq.f32.partialorder %v328, 8.507059e+37
    %v330 = vand.u32 %v318, 2147483648
    %v331 = vor.u32 1.1754944e-38, %v330
    %v332 = vsel %vm329, %v331, %v327
    %v333 = vmul.f32 1.0, %v332
    %v335 = vrot.slane %v253, 1
    %v337 = vadd.f32 %v335, %v292
    %v338 = vxor.u32 %v337, 2147483648
    %v339 = vmul.f32 %v338, 1.442695
    %v340 = vpow.pop %v339
    %v341 = vadd.f32 %v340, 1.0
    %v342 = vrcp.pop %v341
    %v343 = vmul.f32 %v341, %v342
    %v344 = vsub.f32 1.0, %v343
    %v345 = vmul.f32 %v342, %v344
    %v346 = vadd.f32 %v342, %v345
    %vm347 = vweird.f32 %v341
    %vm348 = vweird.f32 %v342
    %vm349 = vmor %vm347, %vm348
    %v350 = vsel %vm349, %v342, %v346
    %v351 = vand.u32 2147483647, %v341
    %vm352 = vcmp.eq.f32.partialorder %v351, 8.507059e+37
    %v353 = vand.u32 %v341, 2147483648
    %v354 = vor.u32 1.1754944e-38, %v353
    %v355 = vsel %vm352, %v354, %v350
    %v356 = vmul.f32 1.0, %v355
    %v357 = vmul.f32 %v333, %v312
    %v358 = vrot.slane %v253, 2
    %v360 = vadd.f32 %v358, %v357
    %v361 = vtanh.pop %v360
    %v362 = vsub.f32 1.0, %v356
    %v363 = vmul.f32 %v362, %v361
    %v364 = vmul.f32 %v356, %v250
    %v365 = vadd.f32 %v363, %v364
    %366 = vst [vmem:[#allocation11 + $0x1] sm:$0x1] %v365
    %s367 = scalar_lea.vmem [#allocation3], 2
    %v368 = vld [vmem:[%s367] ss:$8 sm:$0x7]
    %369 = vmatpush.msra.mxu0 %v126
    %370 = vmatpush.msra.mxu0 %v123
    %371 = vmatpush.msra.mxu0 %v120
    %372 = vmatpush.msra.mxu0 %v117
    %373 = vmatpush.msra.mxu0 %v114
    %374 = vmatpush.msra.mxu0 %v111
    %375 = vmatpush.msra.mxu0 %v108
    %376 = vmatpush.msra.mxu0 %v105
    %377 = vmatpush.msra.mxu0 %v102
    %378 = vmatpush.msra.mxu0 %v99
    %379 = vmatpush.msra.mxu0 %v96
    %380 = vmatpush.msra.mxu0 %v93
    %381 = vmatpush.msra.mxu0 %v90
    %382 = vmatpush.msra.mxu0 %v87
    %383 = vmatpush.msra.mxu0 %v84
    %384 = vmatpush.msra.mxu0 %v81
    %385 = vmatmul.f32.gmra.mxu0 %v365
    %v386 = vpop.f32.mrf.mxu0
    %v387 = vadd.f32 %v133, %v386
    %388 = vdwg.mxu0
    %389 = vmatpush.msra.mxu0 %v127
    %390 = vmatpush.msra.mxu0 %v124
    %391 = vmatpush.msra.mxu0 %v121
    %392 = vmatpush.msra.mxu0 %v118
    %393 = vmatpush.msra.mxu0 %v115
    %394 = vmatpush.msra.mxu0 %v112
    %395 = vmatpush.msra.mxu0 %v109
    %396 = vmatpush.msra.mxu0 %v106
    %397 = vmatpush.msra.mxu0 %v103
    %398 = vmatpush.msra.mxu0 %v100
    %399 = vmatpush.msra.mxu0 %v97
    %400 = vmatpush.msra.mxu0 %v94
    %401 = vmatpush.msra.mxu0 %v91
    %402 = vmatpush.msra.mxu0 %v88
    %403 = vmatpush.msra.mxu0 %v85
    %404 = vmatpush.msra.mxu0 %v82
    %405 = vmatmul.f32.gmra.mxu0 %v365
    %v406 = vpop.f32.mrf.mxu0
    %v407 = vadd.f32 %v134, %v406
    %408 = vdwg.mxu0
    %409 = vmatpush.msra.mxu0 %v128
    %410 = vmatpush.msra.mxu0 %v125
    %411 = vmatpush.msra.mxu0 %v122
    %412 = vmatpush.msra.mxu0 %v119
    %413 = vmatpush.msra.mxu0 %v116
    %414 = vmatpush.msra.mxu0 %v113
    %415 = vmatpush.msra.mxu0 %v110
    %416 = vmatpush.msra.mxu0 %v107
    %417 = vmatpush.msra.mxu0 %v104
    %418 = vmatpush.msra.mxu0 %v101
    %419 = vmatpush.msra.mxu0 %v98
    %420 = vmatpush.msra.mxu0 %v95
    %421 = vmatpush.msra.mxu0 %v92
    %422 = vmatpush.msra.mxu0 %v89
    %423 = vmatpush.msra.mxu0 %v86
    %424 = vmatpush.msra.mxu0 %v83
    %425 = vmatmul.f32.gmra.mxu0 %v365
    %v426 = vpop.f32.mrf.mxu0
    %v427 = vadd.f32 %v135, %v426
    %428 = vdwg.mxu0
    %v429 = vadd.f32 %v368, %v387
    %v430 = vxor.u32 %v429, 2147483648
    %v431 = vmul.f32 %v430, 1.442695
    %v432 = vpow.pop %v431
    %v433 = vadd.f32 %v432, 1.0
    %v434 = vrcp.pop %v433
    %v435 = vmul.f32 %v433, %v434
    %v436 = vsub.f32 1.0, %v435
    %v437 = vmul.f32 %v434, %v436
    %v438 = vadd.f32 %v434, %v437
    %vm439 = vweird.f32 %v433
    %vm440 = vweird.f32 %v434
    %vm441 = vmor %vm439, %vm440
    %v442 = vsel %vm441, %v434, %v438
    %v443 = vand.u32 2147483647, %v433
    %vm444 = vcmp.eq.f32.partialorder %v443, 8.507059e+37
    %v445 = vand.u32 %v433, 2147483648
    %v446 = vor.u32 1.1754944e-38, %v445
    %v447 = vsel %vm444, %v446, %v442
    %v448 = vmul.f32 1.0, %v447
    %v450 = vrot.slane %v368, 1
    %v452 = vadd.f32 %v450, %v407
    %v453 = vxor.u32 %v452, 2147483648
    %v454 = vmul.f32 %v453, 1.442695
    %v455 = vpow.pop %v454
    %v456 = vadd.f32 %v455, 1.0
    %v457 = vrcp.pop %v456
    %v458 = vmul.f32 %v456, %v457
    %v459 = vsub.f32 1.0, %v458
    %v460 = vmul.f32 %v457, %v459
    %v461 = vadd.f32 %v457, %v460
    %vm462 = vweird.f32 %v456
    %vm463 = vweird.f32 %v457
    %vm464 = vmor %vm462, %vm463
    %v465 = vsel %vm464, %v457, %v461
    %v466 = vand.u32 2147483647, %v456
    %vm467 = vcmp.eq.f32.partialorder %v466, 8.507059e+37
    %v468 = vand.u32 %v456, 2147483648
    %v469 = vor.u32 1.1754944e-38, %v468
    %v470 = vsel %vm467, %v469, %v465
    %v471 = vmul.f32 1.0, %v470
    %v472 = vmul.f32 %v448, %v427
    %v473 = vrot.slane %v368, 2
    %v475 = vadd.f32 %v473, %v472
    %v476 = vtanh.pop %v475
    %v477 = vsub.f32 1.0, %v471
    %v478 = vmul.f32 %v477, %v476
    %v479 = vmul.f32 %v471, %v365
    %v480 = vadd.f32 %v478, %v479
    %481 = vst [vmem:[#allocation11 + $0x2] sm:$0x1] %v480
    %s482 = scalar_lea.vmem [#allocation3], 3
    %v483 = vld [vmem:[%s482] ss:$8 sm:$0x7]
    %484 = vmatpush.msra.mxu0 %v126
    %485 = vmatpush.msra.mxu0 %v123
    %486 = vmatpush.msra.mxu0 %v120
    %487 = vmatpush.msra.mxu0 %v117
    %488 = vmatpush.msra.mxu0 %v114
    %489 = vmatpush.msra.mxu0 %v111
    %490 = vmatpush.msra.mxu0 %v108
    %491 = vmatpush.msra.mxu0 %v105
    %492 = vmatpush.msra.mxu0 %v102
    %493 = vmatpush.msra.mxu0 %v99
    %494 = vmatpush.msra.mxu0 %v96
    %495 = vmatpush.msra.mxu0 %v93
    %496 = vmatpush.msra.mxu0 %v90
    %497 = vmatpush.msra.mxu0 %v87
    %498 = vmatpush.msra.mxu0 %v84
    %499 = vmatpush.msra.mxu0 %v81
    %500 = vmatmul.f32.gmra.mxu0 %v480
    %v501 = vpop.f32.mrf.mxu0
    %v502 = vadd.f32 %v133, %v501
    %503 = vdwg.mxu0
    %504 = vmatpush.msra.mxu0 %v127
    %505 = vmatpush.msra.mxu0 %v124
    %506 = vmatpush.msra.mxu0 %v121
    %507 = vmatpush.msra.mxu0 %v118
    %508 = vmatpush.msra.mxu0 %v115
    %509 = vmatpush.msra.mxu0 %v112
    %510 = vmatpush.msra.mxu0 %v109
    %511 = vmatpush.msra.mxu0 %v106
    %512 = vmatpush.msra.mxu0 %v103
    %513 = vmatpush.msra.mxu0 %v100
    %514 = vmatpush.msra.mxu0 %v97
    %515 = vmatpush.msra.mxu0 %v94
    %516 = vmatpush.msra.mxu0 %v91
    %517 = vmatpush.msra.mxu0 %v88
    %518 = vmatpush.msra.mxu0 %v85
    %519 = vmatpush.msra.mxu0 %v82
    %520 = vmatmul.f32.gmra.mxu0 %v480
    %v521 = vpop.f32.mrf.mxu0
    %v522 = vadd.f32 %v134, %v521
    %523 = vdwg.mxu0
    %524 = vmatpush.msra.mxu0 %v128
    %525 = vmatpush.msra.mxu0 %v125
    %526 = vmatpush.msra.mxu0 %v122
    %527 = vmatpush.msra.mxu0 %v119
    %528 = vmatpush.msra.mxu0 %v116
    %529 = vmatpush.msra.mxu0 %v113
    %530 = vmatpush.msra.mxu0 %v110
    %531 = vmatpush.msra.mxu0 %v107
    %532 = vmatpush.msra.mxu0 %v104
    %533 = vmatpush.msra.mxu0 %v101
    %534 = vmatpush.msra.mxu0 %v98
    %535 = vmatpush.msra.mxu0 %v95
    %536 = vmatpush.msra.mxu0 %v92
    %537 = vmatpush.msra.mxu0 %v89
    %538 = vmatpush.msra.mxu0 %v86
    %539 = vmatpush.msra.mxu0 %v83
    %540 = vmatmul.f32.gmra.mxu0 %v480
    %v541 = vpop.f32.mrf.mxu0
    %v542 = vadd.f32 %v135, %v541
    %543 = vdwg.mxu0
    %v544 = vadd.f32 %v483, %v502
    %v545 = vxor.u32 %v544, 2147483648
    %v546 = vmul.f32 %v545, 1.442695
    %v547 = vpow.pop %v546
    %v548 = vadd.f32 %v547, 1.0
    %v549 = vrcp.pop %v548
    %v550 = vmul.f32 %v548, %v549
    %v551 = vsub.f32 1.0, %v550
    %v552 = vmul.f32 %v549, %v551
    %v553 = vadd.f32 %v549, %v552
    %vm554 = vweird.f32 %v548
    %vm555 = vweird.f32 %v549
    %vm556 = vmor %vm554, %vm555
    %v557 = vsel %vm556, %v549, %v553
    %v558 = vand.u32 2147483647, %v548
    %vm559 = vcmp.eq.f32.partialorder %v558, 8.507059e+37
    %v560 = vand.u32 %v548, 2147483648
    %v561 = vor.u32 1.1754944e-38, %v560
    %v562 = vsel %vm559, %v561, %v557
    %v563 = vmul.f32 1.0, %v562
    %v565 = vrot.slane %v483, 1
    %v567 = vadd.f32 %v565, %v522
    %v568 = vxor.u32 %v567, 2147483648
    %v569 = vmul.f32 %v568, 1.442695
    %v570 = vpow.pop %v569
    %v571 = vadd.f32 %v570, 1.0
    %v572 = vrcp.pop %v571
    %v573 = vmul.f32 %v571, %v572
    %v574 = vsub.f32 1.0, %v573
    %v575 = vmul.f32 %v572, %v574
    %v576 = vadd.f32 %v572, %v575
    %vm577 = vweird.f32 %v571
    %vm578 = vweird.f32 %v572
    %vm579 = vmor %vm577, %vm578
    %v580 = vsel %vm579, %v572, %v576
    %v581 = vand.u32 2147483647, %v571
    %vm582 = vcmp.eq.f32.partialorder %v581, 8.507059e+37
    %v583 = vand.u32 %v571, 2147483648
    %v584 = vor.u32 1.1754944e-38, %v583
    %v585 = vsel %vm582, %v584, %v580
    %v586 = vmul.f32 1.0, %v585
    %v587 = vmul.f32 %v563, %v542
    %v588 = vrot.slane %v483, 2
    %v590 = vadd.f32 %v588, %v587
    %v591 = vtanh.pop %v590
    %v592 = vsub.f32 1.0, %v586
    %v593 = vmul.f32 %v592, %v591
    %v594 = vmul.f32 %v586, %v480
    %v595 = vadd.f32 %v593, %v594
    %596 = vst [vmem:[#allocation11 + $0x3] sm:$0x1] %v595
    %s597 = scalar_lea.vmem [#allocation3], 4
    %v598 = vld [vmem:[%s597] ss:$8 sm:$0x7]
    %599 = vmatpush.msra.mxu0 %v126
    %600 = vmatpush.msra.mxu0 %v123
    %601 = vmatpush.msra.mxu0 %v120
    %602 = vmatpush.msra.mxu0 %v117
    %603 = vmatpush.msra.mxu0 %v114
    %604 = vmatpush.msra.mxu0 %v111
    %605 = vmatpush.msra.mxu0 %v108
    %606 = vmatpush.msra.mxu0 %v105
    %607 = vmatpush.msra.mxu0 %v102
    %608 = vmatpush.msra.mxu0 %v99
    %609 = vmatpush.msra.mxu0 %v96
    %610 = vmatpush.msra.mxu0 %v93
    %611 = vmatpush.msra.mxu0 %v90
    %612 = vmatpush.msra.mxu0 %v87
    %613 = vmatpush.msra.mxu0 %v84
    %614 = vmatpush.msra.mxu0 %v81
    %615 = vmatmul.f32.gmra.mxu0 %v595
    %v616 = vpop.f32.mrf.mxu0
    %v617 = vadd.f32 %v133, %v616
    %618 = vdwg.mxu0
    %619 = vmatpush.msra.mxu0 %v127
    %620 = vmatpush.msra.mxu0 %v124
    %621 = vmatpush.msra.mxu0 %v121
    %622 = vmatpush.msra.mxu0 %v118
    %623 = vmatpush.msra.mxu0 %v115
    %624 = vmatpush.msra.mxu0 %v112
    %625 = vmatpush.msra.mxu0 %v109
    %626 = vmatpush.msra.mxu0 %v106
    %627 = vmatpush.msra.mxu0 %v103
    %628 = vmatpush.msra.mxu0 %v100
    %629 = vmatpush.msra.mxu0 %v97
    %630 = vmatpush.msra.mxu0 %v94
    %631 = vmatpush.msra.mxu0 %v91
    %632 = vmatpush.msra.mxu0 %v88
    %633 = vmatpush.msra.mxu0 %v85
    %634 = vmatpush.msra.mxu0 %v82
    %635 = vmatmul.f32.gmra.mxu0 %v595
    %v636 = vpop.f32.mrf.mxu0
    %v637 = vadd.f32 %v134, %v636
    %638 = vdwg.mxu0
    %639 = vmatpush.msra.mxu0 %v128
    %640 = vmatpush.msra.mxu0 %v125
    %641 = vmatpush.msra.mxu0 %v122
    %642 = vmatpush.msra.mxu0 %v119
    %643 = vmatpush.msra.mxu0 %v116
    %644 = vmatpush.msra.mxu0 %v113
    %645 = vmatpush.msra.mxu0 %v110
    %646 = vmatpush.msra.mxu0 %v107
    %647 = vmatpush.msra.mxu0 %v104
    %648 = vmatpush.msra.mxu0 %v101
    %649 = vmatpush.msra.mxu0 %v98
    %650 = vmatpush.msra.mxu0 %v95
    %651 = vmatpush.msra.mxu0 %v92
    %652 = vmatpush.msra.mxu0 %v89
    %653 = vmatpush.msra.mxu0 %v86
    %654 = vmatpush.msra.mxu0 %v83
    %655 = vmatmul.f32.gmra.mxu0 %v595
    %v656 = vpop.f32.mrf.mxu0
    %v657 = vadd.f32 %v135, %v656
    %658 = vdwg.mxu0
    %v659 = vadd.f32 %v598, %v617
    %v660 = vxor.u32 %v659, 2147483648
    %v661 = vmul.f32 %v660, 1.442695
    %v662 = vpow.pop %v661
    %v663 = vadd.f32 %v662, 1.0
    %v664 = vrcp.pop %v663
    %v665 = vmul.f32 %v663, %v664
    %v666 = vsub.f32 1.0, %v665
    %v667 = vmul.f32 %v664, %v666
    %v668 = vadd.f32 %v664, %v667
    %vm669 = vweird.f32 %v663
    %vm670 = vweird.f32 %v664
    %vm671 = vmor %vm669, %vm670
    %v672 = vsel %vm671, %v664, %v668
    %v673 = vand.u32 2147483647, %v663
    %vm674 = vcmp.eq.f32.partialorder %v673, 8.507059e+37
    %v675 = vand.u32 %v663, 2147483648
    %v676 = vor.u32 1.1754944e-38, %v675
    %v677 = vsel %vm674, %v676, %v672
    %v678 = vmul.f32 1.0, %v677
    %v680 = vrot.slane %v598, 1
    %v682 = vadd.f32 %v680, %v637
    %v683 = vxor.u32 %v682, 2147483648
    %v684 = vmul.f32 %v683, 1.442695
    %v685 = vpow.pop %v684
    %v686 = vadd.f32 %v685, 1.0
    %v687 = vrcp.pop %v686
    %v688 = vmul.f32 %v686, %v687
    %v689 = vsub.f32 1.0, %v688
    %v690 = vmul.f32 %v687, %v689
    %v691 = vadd.f32 %v687, %v690
    %vm692 = vweird.f32 %v686
    %vm693 = vweird.f32 %v687
    %vm694 = vmor %vm692, %vm693
    %v695 = vsel %vm694, %v687, %v691
    %v696 = vand.u32 2147483647, %v686
    %vm697 = vcmp.eq.f32.partialorder %v696, 8.507059e+37
    %v698 = vand.u32 %v686, 2147483648
    %v699 = vor.u32 1.1754944e-38, %v698
    %v700 = vsel %vm697, %v699, %v695
    %v701 = vmul.f32 1.0, %v700
    %v702 = vmul.f32 %v678, %v657
    %v703 = vrot.slane %v598, 2
    %v705 = vadd.f32 %v703, %v702
    %v706 = vtanh.pop %v705
    %v707 = vsub.f32 1.0, %v701
    %v708 = vmul.f32 %v707, %v706
    %v709 = vmul.f32 %v701, %v595
    %v710 = vadd.f32 %v708, %v709
    %711 = vst [vmem:[#allocation11 + $0x4] sm:$0x1] %v710
    %s712 = scalar_lea.vmem [#allocation3], 5
    %v713 = vld [vmem:[%s712] ss:$8 sm:$0x7]
    %714 = vmatpush.msra.mxu0 %v126
    %715 = vmatpush.msra.mxu0 %v123
    %716 = vmatpush.msra.mxu0 %v120
    %717 = vmatpush.msra.mxu0 %v117
    %718 = vmatpush.msra.mxu0 %v114
    %719 = vmatpush.msra.mxu0 %v111
    %720 = vmatpush.msra.mxu0 %v108
    %721 = vmatpush.msra.mxu0 %v105
    %722 = vmatpush.msra.mxu0 %v102
    %723 = vmatpush.msra.mxu0 %v99
    %724 = vmatpush.msra.mxu0 %v96
    %725 = vmatpush.msra.mxu0 %v93
    %726 = vmatpush.msra.mxu0 %v90
    %727 = vmatpush.msra.mxu0 %v87
    %728 = vmatpush.msra.mxu0 %v84
    %729 = vmatpush.msra.mxu0 %v81
    %730 = vmatmul.f32.gmra.mxu0 %v710
    %v731 = vpop.f32.mrf.mxu0
    %v732 = vadd.f32 %v133, %v731
    %733 = vdwg.mxu0
    %734 = vmatpush.msra.mxu0 %v127
    %735 = vmatpush.msra.mxu0 %v124
    %736 = vmatpush.msra.mxu0 %v121
    %737 = vmatpush.msra.mxu0 %v118
    %738 = vmatpush.msra.mxu0 %v115
    %739 = vmatpush.msra.mxu0 %v112
    %740 = vmatpush.msra.mxu0 %v109
    %741 = vmatpush.msra.mxu0 %v106
    %742 = vmatpush.msra.mxu0 %v103
    %743 = vmatpush.msra.mxu0 %v100
    %744 = vmatpush.msra.mxu0 %v97
    %745 = vmatpush.msra.mxu0 %v94
    %746 = vmatpush.msra.mxu0 %v91
    %747 = vmatpush.msra.mxu0 %v88
    %748 = vmatpush.msra.mxu0 %v85
    %749 = vmatpush.msra.mxu0 %v82
    %750 = vmatmul.f32.gmra.mxu0 %v710
    %v751 = vpop.f32.mrf.mxu0
    %v752 = vadd.f32 %v134, %v751
    %753 = vdwg.mxu0
    %754 = vmatpush.msra.mxu0 %v128
    %755 = vmatpush.msra.mxu0 %v125
    %756 = vmatpush.msra.mxu0 %v122
    %757 = vmatpush.msra.mxu0 %v119
    %758 = vmatpush.msra.mxu0 %v116
    %759 = vmatpush.msra.mxu0 %v113
    %760 = vmatpush.msra.mxu0 %v110
    %761 = vmatpush.msra.mxu0 %v107
    %762 = vmatpush.msra.mxu0 %v104
    %763 = vmatpush.msra.mxu0 %v101
    %764 = vmatpush.msra.mxu0 %v98
    %765 = vmatpush.msra.mxu0 %v95
    %766 = vmatpush.msra.mxu0 %v92
    %767 = vmatpush.msra.mxu0 %v89
    %768 = vmatpush.msra.mxu0 %v86
    %769 = vmatpush.msra.mxu0 %v83
    %770 = vmatmul.f32.gmra.mxu0 %v710
    %v771 = vpop.f32.mrf.mxu0
    %v772 = vadd.f32 %v135, %v771
    %773 = vdwg.mxu0
    %v774 = vadd.f32 %v713, %v732
    %v775 = vxor.u32 %v774, 2147483648
    %v776 = vmul.f32 %v775, 1.442695
    %v777 = vpow.pop %v776
    %v778 = vadd.f32 %v777, 1.0
    %v779 = vrcp.pop %v778
    %v780 = vmul.f32 %v778, %v779
    %v781 = vsub.f32 1.0, %v780
    %v782 = vmul.f32 %v779, %v781
    %v783 = vadd.f32 %v779, %v782
    %vm784 = vweird.f32 %v778
    %vm785 = vweird.f32 %v779
    %vm786 = vmor %vm784, %vm785
    %v787 = vsel %vm786, %v779, %v783
    %v788 = vand.u32 2147483647, %v778
    %vm789 = vcmp.eq.f32.partialorder %v788, 8.507059e+37
    %v790 = vand.u32 %v778, 2147483648
    %v791 = vor.u32 1.1754944e-38, %v790
    %v792 = vsel %vm789, %v791, %v787
    %v793 = vmul.f32 1.0, %v792
    %v795 = vrot.slane %v713, 1
    %v797 = vadd.f32 %v795, %v752
    %v798 = vxor.u32 %v797, 2147483648
    %v799 = vmul.f32 %v798, 1.442695
    %v800 = vpow.pop %v799
    %v801 = vadd.f32 %v800, 1.0
    %v802 = vrcp.pop %v801
    %v803 = vmul.f32 %v801, %v802
    %v804 = vsub.f32 1.0, %v803
    %v805 = vmul.f32 %v802, %v804
    %v806 = vadd.f32 %v802, %v805
    %vm807 = vweird.f32 %v801
    %vm808 = vweird.f32 %v802
    %vm809 = vmor %vm807, %vm808
    %v810 = vsel %vm809, %v802, %v806
    %v811 = vand.u32 2147483647, %v801
    %vm812 = vcmp.eq.f32.partialorder %v811, 8.507059e+37
    %v813 = vand.u32 %v801, 2147483648
    %v814 = vor.u32 1.1754944e-38, %v813
    %v815 = vsel %vm812, %v814, %v810
    %v816 = vmul.f32 1.0, %v815
    %v817 = vmul.f32 %v793, %v772
    %v818 = vrot.slane %v713, 2
    %v820 = vadd.f32 %v818, %v817
    %v821 = vtanh.pop %v820
    %v822 = vsub.f32 1.0, %v816
    %v823 = vmul.f32 %v822, %v821
    %v824 = vmul.f32 %v816, %v710
    %v825 = vadd.f32 %v823, %v824
    %826 = vst [vmem:[#allocation11 + $0x5] sm:$0x1] %v825
    %s827 = scalar_lea.vmem [#allocation3], 6
    %v828 = vld [vmem:[%s827] ss:$8 sm:$0x7]
    %829 = vmatpush.msra.mxu0 %v126
    %830 = vmatpush.msra.mxu0 %v123
    %831 = vmatpush.msra.mxu0 %v120
    %832 = vmatpush.msra.mxu0 %v117
    %833 = vmatpush.msra.mxu0 %v114
    %834 = vmatpush.msra.mxu0 %v111
    %835 = vmatpush.msra.mxu0 %v108
    %836 = vmatpush.msra.mxu0 %v105
    %837 = vmatpush.msra.mxu0 %v102
    %838 = vmatpush.msra.mxu0 %v99
    %839 = vmatpush.msra.mxu0 %v96
    %840 = vmatpush.msra.mxu0 %v93
    %841 = vmatpush.msra.mxu0 %v90
    %842 = vmatpush.msra.mxu0 %v87
    %843 = vmatpush.msra.mxu0 %v84
    %844 = vmatpush.msra.mxu0 %v81
    %845 = vmatmul.f32.gmra.mxu0 %v825
    %v846 = vpop.f32.mrf.mxu0
    %v847 = vadd.f32 %v133, %v846
    %848 = vdwg.mxu0
    %849 = vmatpush.msra.mxu0 %v127
    %850 = vmatpush.msra.mxu0 %v124
    %851 = vmatpush.msra.mxu0 %v121
    %852 = vmatpush.msra.mxu0 %v118
    %853 = vmatpush.msra.mxu0 %v115
    %854 = vmatpush.msra.mxu0 %v112
    %855 = vmatpush.msra.mxu0 %v109
    %856 = vmatpush.msra.mxu0 %v106
    %857 = vmatpush.msra.mxu0 %v103
    %858 = vmatpush.msra.mxu0 %v100
    %859 = vmatpush.msra.mxu0 %v97
    %860 = vmatpush.msra.mxu0 %v94
    %861 = vmatpush.msra.mxu0 %v91
    %862 = vmatpush.msra.mxu0 %v88
    %863 = vmatpush.msra.mxu0 %v85
    %864 = vmatpush.msra.mxu0 %v82
    %865 = vmatmul.f32.gmra.mxu0 %v825
    %v866 = vpop.f32.mrf.mxu0
    %v867 = vadd.f32 %v134, %v866
    %868 = vdwg.mxu0
    %869 = vmatpush.msra.mxu0 %v128
    %870 = vmatpush.msra.mxu0 %v125
    %871 = vmatpush.msra.mxu0 %v122
    %872 = vmatpush.msra.mxu0 %v119
    %873 = vmatpush.msra.mxu0 %v116
    %874 = vmatpush.msra.mxu0 %v113
    %875 = vmatpush.msra.mxu0 %v110
    %876 = vmatpush.msra.mxu0 %v107
    %877 = vmatpush.msra.mxu0 %v104
    %878 = vmatpush.msra.mxu0 %v101
    %879 = vmatpush.msra.mxu0 %v98
    %880 = vmatpush.msra.mxu0 %v95
    %881 = vmatpush.msra.mxu0 %v92
    %882 = vmatpush.msra.mxu0 %v89
    %883 = vmatpush.msra.mxu0 %v86
    %884 = vmatpush.msra.mxu0 %v83
    %885 = vmatmul.f32.gmra.mxu0 %v825
    %v886 = vpop.f32.mrf.mxu0
    %v887 = vadd.f32 %v135, %v886
    %888 = vdwg.mxu0
    %v889 = vadd.f32 %v828, %v847
    %v890 = vxor.u32 %v889, 2147483648
    %v891 = vmul.f32 %v890, 1.442695
    %v892 = vpow.pop %v891
    %v893 = vadd.f32 %v892, 1.0
    %v894 = vrcp.pop %v893
    %v895 = vmul.f32 %v893, %v894
    %v896 = vsub.f32 1.0, %v895
    %v897 = vmul.f32 %v894, %v896
    %v898 = vadd.f32 %v894, %v897
    %vm899 = vweird.f32 %v893
    %vm900 = vweird.f32 %v894
    %vm901 = vmor %vm899, %vm900
    %v902 = vsel %vm901, %v894, %v898
    %v903 = vand.u32 2147483647, %v893
    %vm904 = vcmp.eq.f32.partialorder %v903, 8.507059e+37
    %v905 = vand.u32 %v893, 2147483648
    %v906 = vor.u32 1.1754944e-38, %v905
    %v907 = vsel %vm904, %v906, %v902
    %v908 = vmul.f32 1.0, %v907
    %v910 = vrot.slane %v828, 1
    %v912 = vadd.f32 %v910, %v867
    %v913 = vxor.u32 %v912, 2147483648
    %v914 = vmul.f32 %v913, 1.442695
    %v915 = vpow.pop %v914
    %v916 = vadd.f32 %v915, 1.0
    %v917 = vrcp.pop %v916
    %v918 = vmul.f32 %v916, %v917
    %v919 = vsub.f32 1.0, %v918
    %v920 = vmul.f32 %v917, %v919
    %v921 = vadd.f32 %v917, %v920
    %vm922 = vweird.f32 %v916
    %vm923 = vweird.f32 %v917
    %vm924 = vmor %vm922, %vm923
    %v925 = vsel %vm924, %v917, %v921
    %v926 = vand.u32 2147483647, %v916
    %vm927 = vcmp.eq.f32.partialorder %v926, 8.507059e+37
    %v928 = vand.u32 %v916, 2147483648
    %v929 = vor.u32 1.1754944e-38, %v928
    %v930 = vsel %vm927, %v929, %v925
    %v931 = vmul.f32 1.0, %v930
    %v932 = vmul.f32 %v908, %v887
    %v933 = vrot.slane %v828, 2
    %v935 = vadd.f32 %v933, %v932
    %v936 = vtanh.pop %v935
    %v937 = vsub.f32 1.0, %v931
    %v938 = vmul.f32 %v937, %v936
    %v939 = vmul.f32 %v931, %v825
    %v940 = vadd.f32 %v938, %v939
    %941 = vst [vmem:[#allocation11 + $0x6] sm:$0x1] %v940
    %s942 = scalar_lea.vmem [#allocation3], 7
    %v943 = vld [vmem:[%s942] ss:$8 sm:$0x7]
    %944 = vmatpush.msra.mxu0 %v126
    %945 = vmatpush.msra.mxu0 %v123
    %946 = vmatpush.msra.mxu0 %v120
    %947 = vmatpush.msra.mxu0 %v117
    %948 = vmatpush.msra.mxu0 %v114
    %949 = vmatpush.msra.mxu0 %v111
    %950 = vmatpush.msra.mxu0 %v108
    %951 = vmatpush.msra.mxu0 %v105
    %952 = vmatpush.msra.mxu0 %v102
    %953 = vmatpush.msra.mxu0 %v99
    %954 = vmatpush.msra.mxu0 %v96
    %955 = vmatpush.msra.mxu0 %v93
    %956 = vmatpush.msra.mxu0 %v90
    %957 = vmatpush.msra.mxu0 %v87
    %958 = vmatpush.msra.mxu0 %v84
    %959 = vmatpush.msra.mxu0 %v81
    %960 = vmatmul.f32.gmra.mxu0 %v940
    %v961 = vpop.f32.mrf.mxu0
    %v962 = vadd.f32 %v133, %v961
    %963 = vdwg.mxu0
    %964 = vmatpush.msra.mxu0 %v127
    %965 = vmatpush.msra.mxu0 %v124
    %966 = vmatpush.msra.mxu0 %v121
    %967 = vmatpush.msra.mxu0 %v118
    %968 = vmatpush.msra.mxu0 %v115
    %969 = vmatpush.msra.mxu0 %v112
    %970 = vmatpush.msra.mxu0 %v109
    %971 = vmatpush.msra.mxu0 %v106
    %972 = vmatpush.msra.mxu0 %v103
    %973 = vmatpush.msra.mxu0 %v100
    %974 = vmatpush.msra.mxu0 %v97
    %975 = vmatpush.msra.mxu0 %v94
    %976 = vmatpush.msra.mxu0 %v91
    %977 = vmatpush.msra.mxu0 %v88
    %978 = vmatpush.msra.mxu0 %v85
    %979 = vmatpush.msra.mxu0 %v82
    %980 = vmatmul.f32.gmra.mxu0 %v940
    %v981 = vpop.f32.mrf.mxu0
    %v982 = vadd.f32 %v134, %v981
    %983 = vdwg.mxu0
    %984 = vmatpush.msra.mxu0 %v128
    %985 = vmatpush.msra.mxu0 %v125
    %986 = vmatpush.msra.mxu0 %v122
    %987 = vmatpush.msra.mxu0 %v119
    %988 = vmatpush.msra.mxu0 %v116
    %989 = vmatpush.msra.mxu0 %v113
    %990 = vmatpush.msra.mxu0 %v110
    %991 = vmatpush.msra.mxu0 %v107
    %992 = vmatpush.msra.mxu0 %v104
    %993 = vmatpush.msra.mxu0 %v101
    %994 = vmatpush.msra.mxu0 %v98
    %995 = vmatpush.msra.mxu0 %v95
    %996 = vmatpush.msra.mxu0 %v92
    %997 = vmatpush.msra.mxu0 %v89
    %998 = vmatpush.msra.mxu0 %v86
    %999 = vmatpush.msra.mxu0 %v83
    %1000 = vmatmul.f32.gmra.mxu0 %v940
    %v1001 = vpop.f32.mrf.mxu0
    %v1002 = vadd.f32 %v135, %v1001
    %1003 = vdwg.mxu0
    %v1004 = vadd.f32 %v943, %v962
    %v1005 = vxor.u32 %v1004, 2147483648
    %v1006 = vmul.f32 %v1005, 1.442695
    %v1007 = vpow.pop %v1006
    %v1008 = vadd.f32 %v1007, 1.0
    %v1009 = vrcp.pop %v1008
    %v1010 = vmul.f32 %v1008, %v1009
    %v1011 = vsub.f32 1.0, %v1010
    %v1012 = vmul.f32 %v1009, %v1011
    %v1013 = vadd.f32 %v1009, %v1012
    %vm1014 = vweird.f32 %v1008
    %vm1015 = vweird.f32 %v1009
    %vm1016 = vmor %vm1014, %vm1015
    %v1017 = vsel %vm1016, %v1009, %v1013
    %v1018 = vand.u32 2147483647, %v1008
    %vm1019 = vcmp.eq.f32.partialorder %v1018, 8.507059e+37
    %v1020 = vand.u32 %v1008, 2147483648
    %v1021 = vor.u32 1.1754944e-38, %v1020
    %v1022 = vsel %vm1019, %v1021, %v1017
    %v1023 = vmul.f32 1.0, %v1022
    %v1025 = vrot.slane %v943, 1
    %v1027 = vadd.f32 %v1025, %v982
    %v1028 = vxor.u32 %v1027, 2147483648
    %v1029 = vmul.f32 %v1028, 1.442695
    %v1030 = vpow.pop %v1029
    %v1031 = vadd.f32 %v1030, 1.0
    %v1032 = vrcp.pop %v1031
    %v1033 = vmul.f32 %v1031, %v1032
    %v1034 = vsub.f32 1.0, %v1033
    %v1035 = vmul.f32 %v1032, %v1034
    %v1036 = vadd.f32 %v1032, %v1035
    %vm1037 = vweird.f32 %v1031
    %vm1038 = vweird.f32 %v1032
    %vm1039 = vmor %vm1037, %vm1038
    %v1040 = vsel %vm1039, %v1032, %v1036
    %v1041 = vand.u32 2147483647, %v1031
    %vm1042 = vcmp.eq.f32.partialorder %v1041, 8.507059e+37
    %v1043 = vand.u32 %v1031, 2147483648
    %v1044 = vor.u32 1.1754944e-38, %v1043
    %v1045 = vsel %vm1042, %v1044, %v1040
    %v1046 = vmul.f32 1.0, %v1045
    %v1047 = vmul.f32 %v1023, %v1002
    %v1048 = vrot.slane %v943, 2
    %v1050 = vadd.f32 %v1048, %v1047
    %v1051 = vtanh.pop %v1050
    %v1052 = vsub.f32 1.0, %v1046
    %v1053 = vmul.f32 %v1052, %v1051
    %v1054 = vmul.f32 %v1046, %v940
    %v1055 = vadd.f32 %v1053, %v1054
    %1056 = vst [vmem:[#allocation11 + $0x7] sm:$0x1] %v1055
    %1057 = vst [vmem:[#allocation2] sm:$0x1] %v1055
    // Predicated region
    $region38: #{tpu_custom_call.1} parent=1 // pred_check
      _
    $region39: #{tpu_custom_call.1} parent=1 // pred_check_branch
      %1059 = sbr.rel (0) target = $region41
    $region40: #{tpu_custom_call.1} parent=1 // pred_region
      %1061 = vsyncadd [#allocation5], 0
      %s1063 = sshll.u32 [#allocation11], 4
      %s1064 = int_to_ptr.vmem [resolvable:$true] %s1063
      %s1065 = sshll.u32 %s4, 4
      %s1066 = int_to_ptr.hbm [resolvable:$true] %s1065
      %1068 = dma.vmem_to_hbm [thread:$0]  %s1064, 128, %s1066, [#allocation5]
    $region41: #{tpu_custom_call.1} parent=1 // pred_fallthru
      _
    // Predicated region
    $region42: #{tpu_custom_call.1} parent=1 // pred_check
      _
    $region43: #{tpu_custom_call.1} parent=1 // pred_check_branch
      %1070 = sbr.rel (0) target = $region45
    $region44: #{tpu_custom_call.1} parent=1 // pred_region
      %1072 = dma.done [#allocation5], 128
    $region45: #{tpu_custom_call.1} parent=1 // pred_fallthru
      _
    %1073 = vsyncpa [#allocation4], 1
    %1074 = vsyncpa [#allocation7], 1
    %1075 = vsyncpa [#allocation10], 1
    %1076 = vsyncpa [#allocation5], 1

</llo_original>
